<compile_context>
chip_gen: v5e
topology: v5e:2x2
jax: 0.10.0
libtpu: 0.0.40
codegen_flags: <defaults>
</compile_context>

<pallas_src>
from functools import partial

import jax
import jax.numpy as jnp
import numpy as np
from jax.experimental import pallas as pl
from jax.experimental.pallas import tpu as pltpu


def _layer_norm(x, w, b, eps=1e-5):
    # PyTorch LayerNorm: biased variance, eps inside sqrt.
    mu = jnp.mean(x, axis=-1, keepdims=True)
    var = jnp.mean((x - mu) ** 2, axis=-1, keepdims=True)
    return (x - mu) * jax.lax.rsqrt(var + eps) * w + b


def fused_encoder_kernel(nhead, compute_dtype,
                         x_ref,
                         wqkv_ref, bqkv_ref, wo_ref, bo_ref,
                         ln1w_ref, ln1b_ref, ln2w_ref, ln2b_ref,
                         w1_ref, b1_ref, w2_ref, b2_ref,
                         out_ref, act_ref):
    l = pl.program_id(1)
    n_layers = pl.num_programs(1)

    # Load the input activation into the VMEM-resident buffer on the first layer.
    @pl.when(l == 0)
    def _():
        act_ref[...] = x_ref[...].astype(jnp.float32)

    Bb, S, E = act_ref.shape
    R = Bb * S
    H = nhead
    Dh = E // H
    cdt = compute_dtype                     # MXU operand dtype (f32 or bf16)

    x = act_ref[...].reshape(R, E)          # f32 resident activation
    xc = x.astype(cdt)

    # --- self attention: fused QKV projection (weights pre-transposed (E,3E);
    #     1/sqrt(Dh) already folded into the Q weights/bias on the host) ---
    qkv = jnp.dot(xc, wqkv_ref[0], preferred_element_type=jnp.float32) + bqkv_ref[0]
    q3 = qkv[:, 0:E].reshape(Bb, S, E)
    k3 = qkv[:, E:2 * E].reshape(Bb, S, E)
    v3 = qkv[:, 2 * E:3 * E].reshape(Bb, S, E)

    wo = wo_ref[0]                          # (E, E) pre-transposed out-projection

    # Per-head attention, batched over the Bb block-batch elements.  Each
    # head's output is accumulated through its slice of the output projection
    # (no lane-axis concatenation).
    acc = jnp.zeros((R, E), jnp.float32)
    for h in range(H):                      # static, unrolled
        sl = slice(h * Dh, (h + 1) * Dh)
        qh = q3[:, :, sl].astype(cdt)
        kh = k3[:, :, sl].astype(cdt)
        vh = v3[:, :, sl].astype(cdt)
        s = jnp.einsum('bqd,bkd->bqk', qh, kh,
                       preferred_element_type=jnp.float32)
        s = s - jnp.max(s, axis=-1, keepdims=True)
        p = jnp.exp(s)
        p = p * pl.reciprocal(jnp.sum(p, axis=-1, keepdims=True), approx=True)
        oh = jnp.einsum('bqk,bkd->bqd', p.astype(cdt), vh,
                        preferred_element_type=jnp.float32)        # (Bb,S,Dh)
        acc = acc + jnp.dot(oh.reshape(R, Dh).astype(cdt), wo[sl, :],
                            preferred_element_type=jnp.float32)
    attn = acc + bo_ref[0]

    # --- residual + LayerNorm 1 (norm_first=False) ---
    x1 = _layer_norm(x + attn, ln1w_ref[0], ln1b_ref[0])

    # --- feed forward: linear1 -> ReLU -> linear2 (weights pre-transposed) ---
    h1 = jnp.dot(x1.astype(cdt), w1_ref[0], preferred_element_type=jnp.float32) + b1_ref[0]
    h1 = jnp.maximum(h1, 0.0)
    ff = jnp.dot(h1.astype(cdt), w2_ref[0], preferred_element_type=jnp.float32) + b2_ref[0]

    # --- residual + LayerNorm 2 ---
    y = _layer_norm(x1 + ff, ln2w_ref[0], ln2b_ref[0])

    # Keep the activation resident for the next layer step.
    act_ref[...] = y.reshape(Bb, S, E)

    # Only the last layer's result is written to the HBM output block.
    @pl.when(l == n_layers - 1)
    def _():
        out_ref[...] = y.reshape(Bb, S, E).astype(out_ref.dtype)


def _pack_params(layer_params, nhead, mxu_dtype):
    """Stack per-layer params with a leading L dim; pre-transpose matmul
    weights and fold the attention scale into the Q projection."""
    f32 = jnp.float32
    E = layer_params[0]["wo"].shape[0]
    Dh = E // nhead
    scale = 1.0 / float(np.sqrt(Dh))

    stack = lambda name: jnp.stack([p[name] for p in layer_params])
    stack_t = lambda name: jnp.stack([p[name].T for p in layer_params])

    # Fold 1/sqrt(Dh) into the Q third of the QKV projection (host-side).
    qscale = jnp.concatenate([jnp.full((E,), scale, f32),
                              jnp.ones((2 * E,), f32)])
    wqkv_t = stack_t("wqkv") * qscale           # (L, E, 3E)
    bqkv = stack("bqkv") * qscale               # (L, 1, 3E)

    return dict(
        wqkv_t=wqkv_t.astype(mxu_dtype),
        bqkv=bqkv.astype(f32),
        wo_t=stack_t("wo").astype(mxu_dtype),   # (L, E, E)
        bo=stack("bo").astype(f32),             # (L, 1, E)
        ln1w=stack("ln1w").astype(f32), ln1b=stack("ln1b").astype(f32),
        ln2w=stack("ln2w").astype(f32), ln2b=stack("ln2b").astype(f32),
        w1_t=stack_t("w1").astype(mxu_dtype),   # (L, E, Fd)
        b1=stack("b1").astype(f32),             # (L, 1, Fd)
        w2_t=stack_t("w2").astype(mxu_dtype),   # (L, Fd, E)
        b2=stack("b2").astype(f32),             # (L, 1, E)
    )


def _pick_block_batch(B, S, target_rows=256):
    """Largest divisor of B whose row count Bb*S stays <= ~256 (MXU fill)."""
    bb = 1
    for d in range(1, B + 1):
        if B % d == 0 and d * S <= max(S, target_rows):
            bb = d
    return bb


def transformer_encoder(x, layer_params, nhead, *,
                        mxu_dtype=jnp.float32, block_batch=None,
                        vmem_limit_bytes=None):
    """Fused L-layer TransformerEncoder forward in a single pallas_call."""
    B, S, E = x.shape
    L = len(layer_params)
    Fd = layer_params[0]["w1"].shape[0]
    assert E % nhead == 0

    packed = _pack_params(layer_params, nhead, mxu_dtype)

    Bb = block_batch if block_batch is not None else _pick_block_batch(B, S)
    assert B % Bb == 0
    grid = (B // Bb, L)   # layer axis innermost ("arbitrary"), batch "parallel"

    def wspec(shape):
        nd = len(shape)
        return pl.BlockSpec((1,) + shape, lambda b, l, _nd=nd: (l,) + (0,) * _nd)

    in_specs = [
        pl.BlockSpec((Bb, S, E), lambda b, l: (b, 0, 0)),   # activations
        wspec((E, 3 * E)), wspec((1, 3 * E)),               # wqkv_t, bqkv
        wspec((E, E)), wspec((1, E)),                       # wo_t, bo
        wspec((1, E)), wspec((1, E)), wspec((1, E)), wspec((1, E)),  # ln1/ln2
        wspec((E, Fd)), wspec((1, Fd)),                     # w1_t, b1
        wspec((Fd, E)), wspec((1, E)),                      # w2_t, b2
    ]

    return pl.pallas_call(
        partial(fused_encoder_kernel, nhead, mxu_dtype),
        out_shape=jax.ShapeDtypeStruct((B, S, E), x.dtype),
        grid_spec=pltpu.PrefetchScalarGridSpec(
            num_scalar_prefetch=0,
            grid=grid,
            in_specs=in_specs,
            out_specs=pl.BlockSpec((Bb, S, E), lambda b, l: (b, 0, 0)),
            scratch_shapes=[pltpu.VMEM((Bb, S, E), jnp.float32)],
        ),
        compiler_params=pltpu.CompilerParams(
            dimension_semantics=("parallel", "arbitrary"),
            vmem_limit_bytes=vmem_limit_bytes),
    )(x, packed["wqkv_t"], packed["bqkv"], packed["wo_t"], packed["bo"],
      packed["ln1w"], packed["ln1b"], packed["ln2w"], packed["ln2b"],
      packed["w1_t"], packed["b1"], packed["w2_t"], packed["b2"])


# ---------------- pure-JAX reference for sanity checking ----------------
def _ref_layer(x, p, nhead):
    B, S, E = x.shape
    Dh = E // nhead
    qkv = x @ p["wqkv"].T + p["bqkv"][0]
    q, k, v = qkv[..., :E], qkv[..., E:2 * E], qkv[..., 2 * E:]

    def split(t):  # (B,S,E) -> (B,H,S,Dh)
        return t.reshape(B, S, nhead, Dh).transpose(0, 2, 1, 3)

    qh, kh, vh = split(q), split(k), split(v)
    s = jnp.einsum("bhqd,bhkd->bhqk", qh, kh) / np.sqrt(Dh)
    pw = jax.nn.softmax(s, axis=-1)
    a = jnp.einsum("bhqk,bhkd->bhqd", pw, vh).transpose(0, 2, 1, 3).reshape(B, S, E)
    a = a @ p["wo"].T + p["bo"][0]

    def ln(t, w, b):
        mu = t.mean(-1, keepdims=True)
        var = ((t - mu) ** 2).mean(-1, keepdims=True)
        return (t - mu) / jnp.sqrt(var + 1e-5) * w[0] + b[0]

    x1 = ln(x + a, p["ln1w"], p["ln1b"])
    ff = jnp.maximum(x1 @ p["w1"].T + p["b1"][0], 0.0) @ p["w2"].T + p["b2"][0]
    return ln(x1 + ff, p["ln2w"], p["ln2b"])


def _ref(x, layer_params, nhead):
    out = x
    for p in layer_params:
        out = _ref_layer(out, p, nhead)
    return out


def init_layer_params(key, E, Fd):
    ks = jax.random.split(key, 8)
    s = 0.02
    return {
        "wqkv": s * jax.random.normal(ks[0], (3 * E, E), jnp.float32),
        "bqkv": s * jax.random.normal(ks[1], (1, 3 * E), jnp.float32),
        "wo": s * jax.random.normal(ks[2], (E, E), jnp.float32),
        "bo": s * jax.random.normal(ks[3], (1, E), jnp.float32),
        "ln1w": jnp.ones((1, E), jnp.float32),
        "ln1b": jnp.zeros((1, E), jnp.float32),
        "ln2w": jnp.ones((1, E), jnp.float32),
        "ln2b": jnp.zeros((1, E), jnp.float32),
        "w1": s * jax.random.normal(ks[4], (Fd, E), jnp.float32),
        "b1": s * jax.random.normal(ks[5], (1, Fd), jnp.float32),
        "w2": s * jax.random.normal(ks[6], (E, Fd), jnp.float32),
        "b2": s * jax.random.normal(ks[7], (1, E), jnp.float32),
    }


if __name__ == "__main__":
    B, S, E, H, Fd, L = 2, 8, 32, 4, 64, 2   # batch, seq, d_model, nhead, dim_ff, layers

    key = jax.random.PRNGKey(0)
    kx, kp = jax.random.split(key)
    src = jax.random.normal(kx, (B, S, E), jnp.float32)

    layer_keys = jax.random.split(kp, L)
    layer_params = [init_layer_params(k, E, Fd) for k in layer_keys]

    ref = _ref(src, layer_params, H)

    # f32 MXU operands: tight check against the f32 reference.
    out_f32 = jax.block_until_ready(
        transformer_encoder(src, layer_params, H, mxu_dtype=jnp.float32))
    np.testing.assert_allclose(np.asarray(out_f32), np.asarray(ref),
                               rtol=2e-3, atol=2e-3)

    # bf16 MXU operands (v6e/v7x fast path): looser check.
    out_bf16 = jax.block_until_ready(
        transformer_encoder(src, layer_params, H, mxu_dtype=jnp.bfloat16))
    np.testing.assert_allclose(np.asarray(out_bf16), np.asarray(ref),
                               rtol=3e-2, atol=3e-2)

    print("KERNEL_OK")
</pallas_src>

<mosaic_0001>
module attributes {stable_mosaic.version = 11 : i64} {
  func.func @fused_encoder_kernel(%arg0: i32, %arg1: i32, %arg2: memref<2x8x32xf32, #tpu.memory_space<vmem>>, %arg3: memref<1x32x96xf32, #tpu.memory_space<vmem>>, %arg4: memref<1x1x96xf32, #tpu.memory_space<vmem>>, %arg5: memref<1x32x32xf32, #tpu.memory_space<vmem>>, %arg6: memref<1x1x32xf32, #tpu.memory_space<vmem>>, %arg7: memref<1x1x32xf32, #tpu.memory_space<vmem>>, %arg8: memref<1x1x32xf32, #tpu.memory_space<vmem>>, %arg9: memref<1x1x32xf32, #tpu.memory_space<vmem>>, %arg10: memref<1x1x32xf32, #tpu.memory_space<vmem>>, %arg11: memref<1x32x64xf32, #tpu.memory_space<vmem>>, %arg12: memref<1x1x64xf32, #tpu.memory_space<vmem>>, %arg13: memref<1x64x32xf32, #tpu.memory_space<vmem>>, %arg14: memref<1x1x32xf32, #tpu.memory_space<vmem>>, %arg15: memref<2x8x32xf32, #tpu.memory_space<vmem>>, %arg16: memref<2x8x32xf32, #tpu.memory_space<vmem>>) attributes {dimension_semantics = [#tpu.dimension_semantics<parallel>, #tpu.dimension_semantics<arbitrary>], iteration_bounds = array<i64: 1, 2>, scalar_prefetch = 0 : i64, scratch_operands = 1 : i64, tpu.core_type = #tpu.core_type<tc>, window_params = [{transform_indices = @transform_0, window_bounds = array<i64: 2, 8, 32>}, {transform_indices = @transform_1, window_bounds = array<i64: 1, 32, 96>}, {transform_indices = @transform_2, window_bounds = array<i64: 1, 1, 96>}, {transform_indices = @transform_3, window_bounds = array<i64: 1, 32, 32>}, {transform_indices = @transform_4, window_bounds = array<i64: 1, 1, 32>}, {transform_indices = @transform_5, window_bounds = array<i64: 1, 1, 32>}, {transform_indices = @transform_6, window_bounds = array<i64: 1, 1, 32>}, {transform_indices = @transform_7, window_bounds = array<i64: 1, 1, 32>}, {transform_indices = @transform_8, window_bounds = array<i64: 1, 1, 32>}, {transform_indices = @transform_9, window_bounds = array<i64: 1, 32, 64>}, {transform_indices = @transform_10, window_bounds = array<i64: 1, 1, 64>}, {transform_indices = @transform_11, window_bounds = array<i64: 1, 64, 32>}, {transform_indices = @transform_12, window_bounds = array<i64: 1, 1, 32>}, {transform_indices = @transform_13, window_bounds = array<i64: 2, 8, 32>}]} {
    %c0_i32 = arith.constant 0 : i32
    %0 = arith.cmpi eq, %arg1, %c0_i32 : i32
    %1 = arith.extui %0 : i1 to i32
    %c0_i32_0 = arith.constant 0 : i32
    %2 = arith.cmpi ne, %1, %c0_i32_0 : i32
    scf.if %2 {
      %c0_77 = arith.constant 0 : index
      %c0_78 = arith.constant 0 : index
      %c0_79 = arith.constant 0 : index
      %176 = vector.load %arg2[%c0_77, %c0_78, %c0_79] : memref<2x8x32xf32, #tpu.memory_space<vmem>>, vector<2x8x32xf32>
      %c0_80 = arith.constant 0 : index
      %c0_81 = arith.constant 0 : index
      %c0_82 = arith.constant 0 : index
      %177 = vector.load %arg16[%c0_80, %c0_81, %c0_82] : memref<2x8x32xf32, #tpu.memory_space<vmem>>, vector<2x8x32xf32>
      tpu.vector_store %arg16[%c0_80, %c0_81, %c0_82], %176 {strides = array<i32>} : memref<2x8x32xf32, #tpu.memory_space<vmem>>, vector<2x8x32xf32>,
    } else {
    }
    %c0 = arith.constant 0 : index
    %c0_1 = arith.constant 0 : index
    %c0_2 = arith.constant 0 : index
    %3 = vector.load %arg16[%c0, %c0_1, %c0_2] : memref<2x8x32xf32, #tpu.memory_space<vmem>>, vector<2x8x32xf32>
    %4 = vector.shape_cast %3 : vector<2x8x32xf32> to vector<16x32xf32>
    %c0_3 = arith.constant 0 : index
    %c0_4 = arith.constant 0 : index
    %c0_5 = arith.constant 0 : index
    %5 = vector.load %arg3[%c0_3, %c0_4, %c0_5] : memref<1x32x96xf32, #tpu.memory_space<vmem>>, vector<1x32x96xf32>
    %6 = vector.shape_cast %5 : vector<1x32x96xf32> to vector<32x96xf32>
    %cst = arith.constant dense<0.000000e+00> : vector<16x96xf32>
    %7 = tpu.matmul %4, %6, %cst {dimension_numbers = #tpu.dot_dimension_numbers<[1], [0], [0], [1], [0, 0, 1, 1], [], []>} : vector<16x32xf32>, vector<32x96xf32>, vector<16x96xf32> -> vector<16x96xf32>
    %c0_6 = arith.constant 0 : index
    %c0_7 = arith.constant 0 : index
    %c0_8 = arith.constant 0 : index
    %8 = vector.load %arg4[%c0_6, %c0_7, %c0_8] : memref<1x1x96xf32, #tpu.memory_space<vmem>>, vector<1x1x96xf32>
    %9 = vector.shape_cast %8 : vector<1x1x96xf32> to vector<1x96xf32>
    %10 = vector.broadcast %9 : vector<1x96xf32> to vector<16x96xf32>
    %11 = arith.addf %7, %10 : vector<16x96xf32>
    %12 = vector.extract_strided_slice %11 {offsets = [0, 0], sizes = [16, 32], strides = [1, 1]} : vector<16x96xf32> to vector<16x32xf32>
    %13 = vector.shape_cast %12 : vector<16x32xf32> to vector<2x8x32xf32>
    %14 = vector.extract_strided_slice %11 {offsets = [0, 32], sizes = [16, 32], strides = [1, 1]} : vector<16x96xf32> to vector<16x32xf32>
    %15 = vector.shape_cast %14 : vector<16x32xf32> to vector<2x8x32xf32>
    %16 = vector.extract_strided_slice %11 {offsets = [0, 64], sizes = [16, 32], strides = [1, 1]} : vector<16x96xf32> to vector<16x32xf32>
    %17 = vector.shape_cast %16 : vector<16x32xf32> to vector<2x8x32xf32>
    %c0_9 = arith.constant 0 : index
    %c0_10 = arith.constant 0 : index
    %c0_11 = arith.constant 0 : index
    %18 = vector.load %arg5[%c0_9, %c0_10, %c0_11] : memref<1x32x32xf32, #tpu.memory_space<vmem>>, vector<1x32x32xf32>
    %19 = vector.shape_cast %18 : vector<1x32x32xf32> to vector<32x32xf32>
    %cst_12 = arith.constant 0.000000e+00 : f32
    %20 = vector.broadcast %cst_12 : f32 to vector<16x32xf32>
    %21 = vector.extract_strided_slice %13 {offsets = [0, 0, 0], sizes = [2, 8, 8], strides = [1, 1, 1]} : vector<2x8x32xf32> to vector<2x8x8xf32>
    %22 = vector.extract_strided_slice %15 {offsets = [0, 0, 0], sizes = [2, 8, 8], strides = [1, 1, 1]} : vector<2x8x32xf32> to vector<2x8x8xf32>
    %23 = vector.extract_strided_slice %17 {offsets = [0, 0, 0], sizes = [2, 8, 8], strides = [1, 1, 1]} : vector<2x8x32xf32> to vector<2x8x8xf32>
    "tpu.trace_start"() <{level = 10 : i32, message = "bqd,bkd->bqk"}> : () -> ()
    %cst_13 = arith.constant dense<0.000000e+00> : vector<2x8x8xf32>
    %24 = tpu.matmul %21, %22, %cst_13 {dimension_numbers = #tpu.dot_dimension_numbers<[2], [2], [1], [1], [0, 0, 0, 1, 1, 1], [0], [0]>} : vector<2x8x8xf32>, vector<2x8x8xf32>, vector<2x8x8xf32> -> vector<2x8x8xf32>
    "tpu.trace_stop"() : () -> ()
    %cst_14 = arith.constant dense<0xFF800000> : vector<2x8xf32>
    %25 = vector.multi_reduction <maximumf>, %24, %cst_14 [2] : vector<2x8x8xf32> to vector<2x8xf32>
    %26 = vector.shape_cast %25 : vector<2x8xf32> to vector<2x8x1xf32>
    %27 = vector.broadcast %26 : vector<2x8x1xf32> to vector<2x8x8xf32>
    %28 = arith.subf %24, %27 : vector<2x8x8xf32>
    %29 = math.exp %28 : vector<2x8x8xf32>
    %cst_15 = arith.constant dense<0.000000e+00> : vector<2x8xf32>
    %30 = vector.multi_reduction <add>, %29, %cst_15 [2] : vector<2x8x8xf32> to vector<2x8xf32>
    %31 = vector.shape_cast %30 : vector<2x8xf32> to vector<2x8x1xf32>
    %32 = tpu.reciprocal %31 {approx = true} : vector<2x8x1xf32> -> vector<2x8x1xf32>
    %33 = vector.broadcast %32 : vector<2x8x1xf32> to vector<2x8x8xf32>
    %34 = arith.mulf %29, %33 : vector<2x8x8xf32>
    "tpu.trace_start"() <{level = 10 : i32, message = "bqk,bkd->bqd"}> : () -> ()
    %cst_16 = arith.constant dense<0.000000e+00> : vector<2x8x8xf32>
    %35 = tpu.matmul %34, %23, %cst_16 {dimension_numbers = #tpu.dot_dimension_numbers<[2], [1], [1], [2], [0, 0, 0, 1, 1, 2], [0], [0]>} : vector<2x8x8xf32>, vector<2x8x8xf32>, vector<2x8x8xf32> -> vector<2x8x8xf32>
    "tpu.trace_stop"() : () -> ()
    %36 = vector.shape_cast %35 : vector<2x8x8xf32> to vector<16x8xf32>
    %37 = vector.extract_strided_slice %19 {offsets = [0, 0], sizes = [8, 32], strides = [1, 1]} : vector<32x32xf32> to vector<8x32xf32>
    %cst_17 = arith.constant dense<0.000000e+00> : vector<16x32xf32>
    %38 = tpu.matmul %36, %37, %cst_17 {dimension_numbers = #tpu.dot_dimension_numbers<[1], [0], [0], [1], [0, 0, 1, 1], [], []>} : vector<16x8xf32>, vector<8x32xf32>, vector<16x32xf32> -> vector<16x32xf32>
    %39 = arith.addf %20, %38 : vector<16x32xf32>
    %40 = vector.extract_strided_slice %13 {offsets = [0, 0, 8], sizes = [2, 8, 8], strides = [1, 1, 1]} : vector<2x8x32xf32> to vector<2x8x8xf32>
    %41 = vector.extract_strided_slice %15 {offsets = [0, 0, 8], sizes = [2, 8, 8], strides = [1, 1, 1]} : vector<2x8x32xf32> to vector<2x8x8xf32>
    %42 = vector.extract_strided_slice %17 {offsets = [0, 0, 8], sizes = [2, 8, 8], strides = [1, 1, 1]} : vector<2x8x32xf32> to vector<2x8x8xf32>
    "tpu.trace_start"() <{level = 10 : i32, message = "bqd,bkd->bqk"}> : () -> ()
    %cst_18 = arith.constant dense<0.000000e+00> : vector<2x8x8xf32>
    %43 = tpu.matmul %40, %41, %cst_18 {dimension_numbers = #tpu.dot_dimension_numbers<[2], [2], [1], [1], [0, 0, 0, 1, 1, 1], [0], [0]>} : vector<2x8x8xf32>, vector<2x8x8xf32>, vector<2x8x8xf32> -> vector<2x8x8xf32>
    "tpu.trace_stop"() : () -> ()
    %cst_19 = arith.constant dense<0xFF800000> : vector<2x8xf32>
    %44 = vector.multi_reduction <maximumf>, %43, %cst_19 [2] : vector<2x8x8xf32> to vector<2x8xf32>
    %45 = vector.shape_cast %44 : vector<2x8xf32> to vector<2x8x1xf32>
    %46 = vector.broadcast %45 : vector<2x8x1xf32> to vector<2x8x8xf32>
    %47 = arith.subf %43, %46 : vector<2x8x8xf32>
    %48 = math.exp %47 : vector<2x8x8xf32>
    %cst_20 = arith.constant dense<0.000000e+00> : vector<2x8xf32>
    %49 = vector.multi_reduction <add>, %48, %cst_20 [2] : vector<2x8x8xf32> to vector<2x8xf32>
    %50 = vector.shape_cast %49 : vector<2x8xf32> to vector<2x8x1xf32>
    %51 = tpu.reciprocal %50 {approx = true} : vector<2x8x1xf32> -> vector<2x8x1xf32>
    %52 = vector.broadcast %51 : vector<2x8x1xf32> to vector<2x8x8xf32>
    %53 = arith.mulf %48, %52 : vector<2x8x8xf32>
    "tpu.trace_start"() <{level = 10 : i32, message = "bqk,bkd->bqd"}> : () -> ()
    %cst_21 = arith.constant dense<0.000000e+00> : vector<2x8x8xf32>
    %54 = tpu.matmul %53, %42, %cst_21 {dimension_numbers = #tpu.dot_dimension_numbers<[2], [1], [1], [2], [0, 0, 0, 1, 1, 2], [0], [0]>} : vector<2x8x8xf32>, vector<2x8x8xf32>, vector<2x8x8xf32> -> vector<2x8x8xf32>
    "tpu.trace_stop"() : () -> ()
    %55 = vector.shape_cast %54 : vector<2x8x8xf32> to vector<16x8xf32>
    %56 = vector.extract_strided_slice %19 {offsets = [8, 0], sizes = [8, 32], strides = [1, 1]} : vector<32x32xf32> to vector<8x32xf32>
    %cst_22 = arith.constant dense<0.000000e+00> : vector<16x32xf32>
    %57 = tpu.matmul %55, %56, %cst_22 {dimension_numbers = #tpu.dot_dimension_numbers<[1], [0], [0], [1], [0, 0, 1, 1], [], []>} : vector<16x8xf32>, vector<8x32xf32>, vector<16x32xf32> -> vector<16x32xf32>
    %58 = arith.addf %39, %57 : vector<16x32xf32>
    %59 = vector.extract_strided_slice %13 {offsets = [0, 0, 16], sizes = [2, 8, 8], strides = [1, 1, 1]} : vector<2x8x32xf32> to vector<2x8x8xf32>
    %60 = vector.extract_strided_slice %15 {offsets = [0, 0, 16], sizes = [2, 8, 8], strides = [1, 1, 1]} : vector<2x8x32xf32> to vector<2x8x8xf32>
    %61 = vector.extract_strided_slice %17 {offsets = [0, 0, 16], sizes = [2, 8, 8], strides = [1, 1, 1]} : vector<2x8x32xf32> to vector<2x8x8xf32>
    "tpu.trace_start"() <{level = 10 : i32, message = "bqd,bkd->bqk"}> : () -> ()
    %cst_23 = arith.constant dense<0.000000e+00> : vector<2x8x8xf32>
    %62 = tpu.matmul %59, %60, %cst_23 {dimension_numbers = #tpu.dot_dimension_numbers<[2], [2], [1], [1], [0, 0, 0, 1, 1, 1], [0], [0]>} : vector<2x8x8xf32>, vector<2x8x8xf32>, vector<2x8x8xf32> -> vector<2x8x8xf32>
    "tpu.trace_stop"() : () -> ()
    %cst_24 = arith.constant dense<0xFF800000> : vector<2x8xf32>
    %63 = vector.multi_reduction <maximumf>, %62, %cst_24 [2] : vector<2x8x8xf32> to vector<2x8xf32>
    %64 = vector.shape_cast %63 : vector<2x8xf32> to vector<2x8x1xf32>
    %65 = vector.broadcast %64 : vector<2x8x1xf32> to vector<2x8x8xf32>
    %66 = arith.subf %62, %65 : vector<2x8x8xf32>
    %67 = math.exp %66 : vector<2x8x8xf32>
    %cst_25 = arith.constant dense<0.000000e+00> : vector<2x8xf32>
    %68 = vector.multi_reduction <add>, %67, %cst_25 [2] : vector<2x8x8xf32> to vector<2x8xf32>
    %69 = vector.shape_cast %68 : vector<2x8xf32> to vector<2x8x1xf32>
    %70 = tpu.reciprocal %69 {approx = true} : vector<2x8x1xf32> -> vector<2x8x1xf32>
    %71 = vector.broadcast %70 : vector<2x8x1xf32> to vector<2x8x8xf32>
    %72 = arith.mulf %67, %71 : vector<2x8x8xf32>
    "tpu.trace_start"() <{level = 10 : i32, message = "bqk,bkd->bqd"}> : () -> ()
    %cst_26 = arith.constant dense<0.000000e+00> : vector<2x8x8xf32>
    %73 = tpu.matmul %72, %61, %cst_26 {dimension_numbers = #tpu.dot_dimension_numbers<[2], [1], [1], [2], [0, 0, 0, 1, 1, 2], [0], [0]>} : vector<2x8x8xf32>, vector<2x8x8xf32>, vector<2x8x8xf32> -> vector<2x8x8xf32>
    "tpu.trace_stop"() : () -> ()
    %74 = vector.shape_cast %73 : vector<2x8x8xf32> to vector<16x8xf32>
    %75 = vector.extract_strided_slice %19 {offsets = [16, 0], sizes = [8, 32], strides = [1, 1]} : vector<32x32xf32> to vector<8x32xf32>
    %cst_27 = arith.constant dense<0.000000e+00> : vector<16x32xf32>
    %76 = tpu.matmul %74, %75, %cst_27 {dimension_numbers = #tpu.dot_dimension_numbers<[1], [0], [0], [1], [0, 0, 1, 1], [], []>} : vector<16x8xf32>, vector<8x32xf32>, vector<16x32xf32> -> vector<16x32xf32>
    %77 = arith.addf %58, %76 : vector<16x32xf32>
    %78 = vector.extract_strided_slice %13 {offsets = [0, 0, 24], sizes = [2, 8, 8], strides = [1, 1, 1]} : vector<2x8x32xf32> to vector<2x8x8xf32>
    %79 = vector.extract_strided_slice %15 {offsets = [0, 0, 24], sizes = [2, 8, 8], strides = [1, 1, 1]} : vector<2x8x32xf32> to vector<2x8x8xf32>
    %80 = vector.extract_strided_slice %17 {offsets = [0, 0, 24], sizes = [2, 8, 8], strides = [1, 1, 1]} : vector<2x8x32xf32> to vector<2x8x8xf32>
    "tpu.trace_start"() <{level = 10 : i32, message = "bqd,bkd->bqk"}> : () -> ()
    %cst_28 = arith.constant dense<0.000000e+00> : vector<2x8x8xf32>
    %81 = tpu.matmul %78, %79, %cst_28 {dimension_numbers = #tpu.dot_dimension_numbers<[2], [2], [1], [1], [0, 0, 0, 1, 1, 1], [0], [0]>} : vector<2x8x8xf32>, vector<2x8x8xf32>, vector<2x8x8xf32> -> vector<2x8x8xf32>
    "tpu.trace_stop"() : () -> ()
    %cst_29 = arith.constant dense<0xFF800000> : vector<2x8xf32>
    %82 = vector.multi_reduction <maximumf>, %81, %cst_29 [2] : vector<2x8x8xf32> to vector<2x8xf32>
    %83 = vector.shape_cast %82 : vector<2x8xf32> to vector<2x8x1xf32>
    %84 = vector.broadcast %83 : vector<2x8x1xf32> to vector<2x8x8xf32>
    %85 = arith.subf %81, %84 : vector<2x8x8xf32>
    %86 = math.exp %85 : vector<2x8x8xf32>
    %cst_30 = arith.constant dense<0.000000e+00> : vector<2x8xf32>
    %87 = vector.multi_reduction <add>, %86, %cst_30 [2] : vector<2x8x8xf32> to vector<2x8xf32>
    %88 = vector.shape_cast %87 : vector<2x8xf32> to vector<2x8x1xf32>
    %89 = tpu.reciprocal %88 {approx = true} : vector<2x8x1xf32> -> vector<2x8x1xf32>
    %90 = vector.broadcast %89 : vector<2x8x1xf32> to vector<2x8x8xf32>
    %91 = arith.mulf %86, %90 : vector<2x8x8xf32>
    "tpu.trace_start"() <{level = 10 : i32, message = "bqk,bkd->bqd"}> : () -> ()
    %cst_31 = arith.constant dense<0.000000e+00> : vector<2x8x8xf32>
    %92 = tpu.matmul %91, %80, %cst_31 {dimension_numbers = #tpu.dot_dimension_numbers<[2], [1], [1], [2], [0, 0, 0, 1, 1, 2], [0], [0]>} : vector<2x8x8xf32>, vector<2x8x8xf32>, vector<2x8x8xf32> -> vector<2x8x8xf32>
    "tpu.trace_stop"() : () -> ()
    %93 = vector.shape_cast %92 : vector<2x8x8xf32> to vector<16x8xf32>
    %94 = vector.extract_strided_slice %19 {offsets = [24, 0], sizes = [8, 32], strides = [1, 1]} : vector<32x32xf32> to vector<8x32xf32>
    %cst_32 = arith.constant dense<0.000000e+00> : vector<16x32xf32>
    %95 = tpu.matmul %93, %94, %cst_32 {dimension_numbers = #tpu.dot_dimension_numbers<[1], [0], [0], [1], [0, 0, 1, 1], [], []>} : vector<16x8xf32>, vector<8x32xf32>, vector<16x32xf32> -> vector<16x32xf32>
    %96 = arith.addf %77, %95 : vector<16x32xf32>
    %c0_33 = arith.constant 0 : index
    %c0_34 = arith.constant 0 : index
    %c0_35 = arith.constant 0 : index
    %97 = vector.load %arg6[%c0_33, %c0_34, %c0_35] : memref<1x1x32xf32, #tpu.memory_space<vmem>>, vector<1x1x32xf32>
    %98 = vector.shape_cast %97 : vector<1x1x32xf32> to vector<1x32xf32>
    %99 = vector.broadcast %98 : vector<1x32xf32> to vector<16x32xf32>
    %100 = arith.addf %96, %99 : vector<16x32xf32>
    %101 = arith.addf %4, %100 : vector<16x32xf32>
    %c0_36 = arith.constant 0 : index
    %c0_37 = arith.constant 0 : index
    %c0_38 = arith.constant 0 : index
    %102 = vector.load %arg7[%c0_36, %c0_37, %c0_38] : memref<1x1x32xf32, #tpu.memory_space<vmem>>, vector<1x1x32xf32>
    %103 = vector.shape_cast %102 : vector<1x1x32xf32> to vector<1x32xf32>
    %c0_39 = arith.constant 0 : index
    %c0_40 = arith.constant 0 : index
    %c0_41 = arith.constant 0 : index
    %104 = vector.load %arg8[%c0_39, %c0_40, %c0_41] : memref<1x1x32xf32, #tpu.memory_space<vmem>>, vector<1x1x32xf32>
    %105 = vector.shape_cast %104 : vector<1x1x32xf32> to vector<1x32xf32>
    %cst_42 = arith.constant dense<0.000000e+00> : vector<16xf32>
    %106 = vector.multi_reduction <add>, %101, %cst_42 [1] : vector<16x32xf32> to vector<16xf32>
    %107 = vector.shape_cast %106 : vector<16xf32> to vector<16x1xf32>
    %cst_43 = arith.constant 3.200000e+01 : f32
    %108 = vector.broadcast %cst_43 : f32 to vector<16x1xf32>
    %109 = arith.divf %107, %108 : vector<16x1xf32>
    %110 = vector.broadcast %109 : vector<16x1xf32> to vector<16x32xf32>
    %111 = arith.subf %101, %110 : vector<16x32xf32>
    %112 = arith.mulf %111, %111 : vector<16x32xf32>
    %cst_44 = arith.constant dense<0.000000e+00> : vector<16xf32>
    %113 = vector.multi_reduction <add>, %112, %cst_44 [1] : vector<16x32xf32> to vector<16xf32>
    %114 = vector.shape_cast %113 : vector<16xf32> to vector<16x1xf32>
    %cst_45 = arith.constant 3.200000e+01 : f32
    %115 = vector.broadcast %cst_45 : f32 to vector<16x1xf32>
    %116 = arith.divf %114, %115 : vector<16x1xf32>
    %117 = vector.broadcast %109 : vector<16x1xf32> to vector<16x32xf32>
    %118 = arith.subf %101, %117 : vector<16x32xf32>
    %cst_46 = arith.constant 9.99999974E-6 : f32
    %119 = vector.broadcast %cst_46 : f32 to vector<16x1xf32>
    %120 = arith.addf %116, %119 : vector<16x1xf32>
    %121 = math.rsqrt %120 : vector<16x1xf32>
    %122 = vector.broadcast %121 : vector<16x1xf32> to vector<16x32xf32>
    %123 = arith.mulf %118, %122 : vector<16x32xf32>
    %124 = vector.broadcast %103 : vector<1x32xf32> to vector<16x32xf32>
    %125 = arith.mulf %123, %124 : vector<16x32xf32>
    %126 = vector.broadcast %105 : vector<1x32xf32> to vector<16x32xf32>
    %127 = arith.addf %125, %126 : vector<16x32xf32>
    %c0_47 = arith.constant 0 : index
    %c0_48 = arith.constant 0 : index
    %c0_49 = arith.constant 0 : index
    %128 = vector.load %arg11[%c0_47, %c0_48, %c0_49] : memref<1x32x64xf32, #tpu.memory_space<vmem>>, vector<1x32x64xf32>
    %129 = vector.shape_cast %128 : vector<1x32x64xf32> to vector<32x64xf32>
    %cst_50 = arith.constant dense<0.000000e+00> : vector<16x64xf32>
    %130 = tpu.matmul %127, %129, %cst_50 {dimension_numbers = #tpu.dot_dimension_numbers<[1], [0], [0], [1], [0, 0, 1, 1], [], []>} : vector<16x32xf32>, vector<32x64xf32>, vector<16x64xf32> -> vector<16x64xf32>
    %c0_51 = arith.constant 0 : index
    %c0_52 = arith.constant 0 : index
    %c0_53 = arith.constant 0 : index
    %131 = vector.load %arg12[%c0_51, %c0_52, %c0_53] : memref<1x1x64xf32, #tpu.memory_space<vmem>>, vector<1x1x64xf32>
    %132 = vector.shape_cast %131 : vector<1x1x64xf32> to vector<1x64xf32>
    %133 = vector.broadcast %132 : vector<1x64xf32> to vector<16x64xf32>
    %134 = arith.addf %130, %133 : vector<16x64xf32>
    %cst_54 = arith.constant 0.000000e+00 : f32
    %135 = vector.broadcast %cst_54 : f32 to vector<16x64xf32>
    %136 = arith.maximumf %134, %135 : vector<16x64xf32>
    %c0_55 = arith.constant 0 : index
    %c0_56 = arith.constant 0 : index
    %c0_57 = arith.constant 0 : index
    %137 = vector.load %arg13[%c0_55, %c0_56, %c0_57] : memref<1x64x32xf32, #tpu.memory_space<vmem>>, vector<1x64x32xf32>
    %138 = vector.shape_cast %137 : vector<1x64x32xf32> to vector<64x32xf32>
    %cst_58 = arith.constant dense<0.000000e+00> : vector<16x32xf32>
    %139 = tpu.matmul %136, %138, %cst_58 {dimension_numbers = #tpu.dot_dimension_numbers<[1], [0], [0], [1], [0, 0, 1, 1], [], []>} : vector<16x64xf32>, vector<64x32xf32>, vector<16x32xf32> -> vector<16x32xf32>
    %c0_59 = arith.constant 0 : index
    %c0_60 = arith.constant 0 : index
    %c0_61 = arith.constant 0 : index
    %140 = vector.load %arg14[%c0_59, %c0_60, %c0_61] : memref<1x1x32xf32, #tpu.memory_space<vmem>>, vector<1x1x32xf32>
    %141 = vector.shape_cast %140 : vector<1x1x32xf32> to vector<1x32xf32>
    %142 = vector.broadcast %141 : vector<1x32xf32> to vector<16x32xf32>
    %143 = arith.addf %139, %142 : vector<16x32xf32>
    %144 = arith.addf %127, %143 : vector<16x32xf32>
    %c0_62 = arith.constant 0 : index
    %c0_63 = arith.constant 0 : index
    %c0_64 = arith.constant 0 : index
    %145 = vector.load %arg9[%c0_62, %c0_63, %c0_64] : memref<1x1x32xf32, #tpu.memory_space<vmem>>, vector<1x1x32xf32>
    %146 = vector.shape_cast %145 : vector<1x1x32xf32> to vector<1x32xf32>
    %c0_65 = arith.constant 0 : index
    %c0_66 = arith.constant 0 : index
    %c0_67 = arith.constant 0 : index
    %147 = vector.load %arg10[%c0_65, %c0_66, %c0_67] : memref<1x1x32xf32, #tpu.memory_space<vmem>>, vector<1x1x32xf32>
    %148 = vector.shape_cast %147 : vector<1x1x32xf32> to vector<1x32xf32>
    %cst_68 = arith.constant dense<0.000000e+00> : vector<16xf32>
    %149 = vector.multi_reduction <add>, %144, %cst_68 [1] : vector<16x32xf32> to vector<16xf32>
    %150 = vector.shape_cast %149 : vector<16xf32> to vector<16x1xf32>
    %cst_69 = arith.constant 3.200000e+01 : f32
    %151 = vector.broadcast %cst_69 : f32 to vector<16x1xf32>
    %152 = arith.divf %150, %151 : vector<16x1xf32>
    %153 = vector.broadcast %152 : vector<16x1xf32> to vector<16x32xf32>
    %154 = arith.subf %144, %153 : vector<16x32xf32>
    %155 = arith.mulf %154, %154 : vector<16x32xf32>
    %cst_70 = arith.constant dense<0.000000e+00> : vector<16xf32>
    %156 = vector.multi_reduction <add>, %155, %cst_70 [1] : vector<16x32xf32> to vector<16xf32>
    %157 = vector.shape_cast %156 : vector<16xf32> to vector<16x1xf32>
    %cst_71 = arith.constant 3.200000e+01 : f32
    %158 = vector.broadcast %cst_71 : f32 to vector<16x1xf32>
    %159 = arith.divf %157, %158 : vector<16x1xf32>
    %160 = vector.broadcast %152 : vector<16x1xf32> to vector<16x32xf32>
    %161 = arith.subf %144, %160 : vector<16x32xf32>
    %cst_72 = arith.constant 9.99999974E-6 : f32
    %162 = vector.broadcast %cst_72 : f32 to vector<16x1xf32>
    %163 = arith.addf %159, %162 : vector<16x1xf32>
    %164 = math.rsqrt %163 : vector<16x1xf32>
    %165 = vector.broadcast %164 : vector<16x1xf32> to vector<16x32xf32>
    %166 = arith.mulf %161, %165 : vector<16x32xf32>
    %167 = vector.broadcast %146 : vector<1x32xf32> to vector<16x32xf32>
    %168 = arith.mulf %166, %167 : vector<16x32xf32>
    %169 = vector.broadcast %148 : vector<1x32xf32> to vector<16x32xf32>
    %170 = arith.addf %168, %169 : vector<16x32xf32>
    %171 = vector.shape_cast %170 : vector<16x32xf32> to vector<2x8x32xf32>
    %c0_73 = arith.constant 0 : index
    %c0_74 = arith.constant 0 : index
    %c0_75 = arith.constant 0 : index
    %172 = vector.load %arg16[%c0_73, %c0_74, %c0_75] : memref<2x8x32xf32, #tpu.memory_space<vmem>>, vector<2x8x32xf32>
    tpu.vector_store %arg16[%c0_73, %c0_74, %c0_75], %171 {strides = array<i32>} : memref<2x8x32xf32, #tpu.memory_space<vmem>>, vector<2x8x32xf32>,
    %c1_i32 = arith.constant 1 : i32
    %173 = arith.cmpi eq, %arg1, %c1_i32 : i32
    %174 = arith.extui %173 : i1 to i32
    %c0_i32_76 = arith.constant 0 : i32
    %175 = arith.cmpi ne, %174, %c0_i32_76 : i32
    scf.if %175 {
      %176 = vector.shape_cast %170 : vector<16x32xf32> to vector<2x8x32xf32>
      %c0_77 = arith.constant 0 : index
      %c0_78 = arith.constant 0 : index
      %c0_79 = arith.constant 0 : index
      %177 = vector.load %arg15[%c0_77, %c0_78, %c0_79] : memref<2x8x32xf32, #tpu.memory_space<vmem>>, vector<2x8x32xf32>
      tpu.vector_store %arg15[%c0_77, %c0_78, %c0_79], %176 {strides = array<i32>} : memref<2x8x32xf32, #tpu.memory_space<vmem>>, vector<2x8x32xf32>,
    } else {
    }
    return
  }
  func.func @transform_0(%arg0: i32, %arg1: i32) -> (i32, i32, i32) {
    %c0_i32 = arith.constant 0 : i32
    %c0_i32_0 = arith.constant 0 : i32
    %c0_i32_1 = arith.constant 0 : i32
    return %arg0, %c0_i32, %c0_i32_0 : i32, i32, i32
  }
  func.func @transform_1(%arg0: i32, %arg1: i32) -> (i32, i32, i32) {
    %c0_i32 = arith.constant 0 : i32
    %c0_i32_0 = arith.constant 0 : i32
    %c0_i32_1 = arith.constant 0 : i32
    return %arg1, %c0_i32, %c0_i32_0 : i32, i32, i32
  }
  func.func @transform_2(%arg0: i32, %arg1: i32) -> (i32, i32, i32) {
    %c0_i32 = arith.constant 0 : i32
    %c0_i32_0 = arith.constant 0 : i32
    %c0_i32_1 = arith.constant 0 : i32
    return %arg1, %c0_i32, %c0_i32_0 : i32, i32, i32
  }
  func.func @transform_3(%arg0: i32, %arg1: i32) -> (i32, i32, i32) {
    %c0_i32 = arith.constant 0 : i32
    %c0_i32_0 = arith.constant 0 : i32
    %c0_i32_1 = arith.constant 0 : i32
    return %arg1, %c0_i32, %c0_i32_0 : i32, i32, i32
  }
  func.func @transform_4(%arg0: i32, %arg1: i32) -> (i32, i32, i32) {
    %c0_i32 = arith.constant 0 : i32
    %c0_i32_0 = arith.constant 0 : i32
    %c0_i32_1 = arith.constant 0 : i32
    return %arg1, %c0_i32, %c0_i32_0 : i32, i32, i32
  }
  func.func @transform_5(%arg0: i32, %arg1: i32) -> (i32, i32, i32) {
    %c0_i32 = arith.constant 0 : i32
    %c0_i32_0 = arith.constant 0 : i32
    %c0_i32_1 = arith.constant 0 : i32
    return %arg1, %c0_i32, %c0_i32_0 : i32, i32, i32
  }
  func.func @transform_6(%arg0: i32, %arg1: i32) -> (i32, i32, i32) {
    %c0_i32 = arith.constant 0 : i32
    %c0_i32_0 = arith.constant 0 : i32
    %c0_i32_1 = arith.constant 0 : i32
    return %arg1, %c0_i32, %c0_i32_0 : i32, i32, i32
  }
  func.func @transform_7(%arg0: i32, %arg1: i32) -> (i32, i32, i32) {
    %c0_i32 = arith.constant 0 : i32
    %c0_i32_0 = arith.constant 0 : i32
    %c0_i32_1 = arith.constant 0 : i32
    return %arg1, %c0_i32, %c0_i32_0 : i32, i32, i32
  }
  func.func @transform_8(%arg0: i32, %arg1: i32) -> (i32, i32, i32) {
    %c0_i32 = arith.constant 0 : i32
    %c0_i32_0 = arith.constant 0 : i32
    %c0_i32_1 = arith.constant 0 : i32
    return %arg1, %c0_i32, %c0_i32_0 : i32, i32, i32
  }
  func.func @transform_9(%arg0: i32, %arg1: i32) -> (i32, i32, i32) {
    %c0_i32 = arith.constant 0 : i32
    %c0_i32_0 = arith.constant 0 : i32
    %c0_i32_1 = arith.constant 0 : i32
    return %arg1, %c0_i32, %c0_i32_0 : i32, i32, i32
  }
  func.func @transform_10(%arg0: i32, %arg1: i32) -> (i32, i32, i32) {
    %c0_i32 = arith.constant 0 : i32
    %c0_i32_0 = arith.constant 0 : i32
    %c0_i32_1 = arith.constant 0 : i32
    return %arg1, %c0_i32, %c0_i32_0 : i32, i32, i32
  }
  func.func @transform_11(%arg0: i32, %arg1: i32) -> (i32, i32, i32) {
    %c0_i32 = arith.constant 0 : i32
    %c0_i32_0 = arith.constant 0 : i32
    %c0_i32_1 = arith.constant 0 : i32
    return %arg1, %c0_i32, %c0_i32_0 : i32, i32, i32
  }
  func.func @transform_12(%arg0: i32, %arg1: i32) -> (i32, i32, i32) {
    %c0_i32 = arith.constant 0 : i32
    %c0_i32_0 = arith.constant 0 : i32
    %c0_i32_1 = arith.constant 0 : i32
    return %arg1, %c0_i32, %c0_i32_0 : i32, i32, i32
  }
  func.func @transform_13(%arg0: i32, %arg1: i32) -> (i32, i32, i32) {
    %c0_i32 = arith.constant 0 : i32
    %c0_i32_0 = arith.constant 0 : i32
    %c0_i32_1 = arith.constant 0 : i32
    return %arg0, %c0_i32, %c0_i32_0 : i32, i32, i32
  }
}

</mosaic_0001>

<llo_original>
// kernel: tpu_custom_call.1
$region0: #{tpu_custom_call.1}
  #allocation0 [shape = 'u32[]', space=smem, size = 0x4, offset = 0x4, fixed_abs, tag = 'smem constant byte address 0x4 - core index']
  #allocation1 [shape = 'u32[72,128]{1,0:T(1,128)}', space=vmem, size = 0x9000, scoped, tag = 'internal scratch']
  #allocation2 [shape = 'f32[2,8,32]{2,1,0:T(8,128)}', space=vmem, size = 0x2000, scoped, tag = 'scratch operand']
  %s0 = inlined_call_operand.hbm [shape: f32[2,8,32], index: 0, kind: input, shape index: {}]
  %s1 = inlined_call_operand.vmem [shape: f32[2,32,96], index: 1, kind: input, shape index: {}]
  %s2 = inlined_call_operand.hbm [shape: f32[2,1,96], index: 2, kind: input, shape index: {}]
  %s3 = inlined_call_operand.vmem [shape: f32[2,32,32], index: 3, kind: input, shape index: {}]
  %s4 = inlined_call_operand.vmem [shape: f32[2,1,32], index: 4, kind: input, shape index: {}]
  %s5 = inlined_call_operand.hbm [shape: f32[2,1,32], index: 5, kind: input, shape index: {}]
  %s6 = inlined_call_operand.vmem [shape: f32[2,1,32], index: 6, kind: input, shape index: {}]
  %s7 = inlined_call_operand.hbm [shape: f32[2,1,32], index: 7, kind: input, shape index: {}]
  %s8 = inlined_call_operand.hbm [shape: f32[2,1,32], index: 8, kind: input, shape index: {}]
  %s9 = inlined_call_operand.vmem [shape: f32[2,32,64], index: 9, kind: input, shape index: {}]
  %s10 = inlined_call_operand.vmem [shape: f32[2,1,64], index: 10, kind: input, shape index: {}]
  %s11 = inlined_call_operand.vmem [shape: f32[2,64,32], index: 11, kind: input, shape index: {}]
  %s12 = inlined_call_operand.vmem [shape: f32[2,1,32], index: 12, kind: input, shape index: {}]
  %s13 = inlined_call_operand.hbm [shape: f32[2,8,32], index: 13, kind: output, shape index: {}]
  %s14 = sld [smem:[#allocation0]]
  $region113: #{tpu_custom_call.1} parent=0
    _
  %s16 = ssub.s32 1, %s14
  %s17 = scalar_select 0, %s16, %s14
  $region1: #{tpu_custom_call.1} parent=0
    #allocation3 [shape = 'u8[8192]{0}', space=vmem, size = 0x2000, scoped, tag = 'input window, operand 0, single buffered']
    #allocation4 [shape = 's32[2]{0}', space=sflag, size = 0x8, scoped, tag = 'scoped memory for tpu_custom_call.1']
    #allocation5 [shape = 's32[2]{0}', space=sflag, size = 0x8, scoped, tag = 'scoped memory for tpu_custom_call.1']
    #allocation6 [shape = 'u8[1024]{0}', space=vmem, size = 0x400, scoped, tag = 'input window, operand 2']
    #allocation7 [shape = 's32[2]{0}', space=sflag, size = 0x8, scoped, tag = 'scoped memory for tpu_custom_call.1']
    #allocation8 [shape = 'u8[1024]{0}', space=vmem, size = 0x400, scoped, tag = 'input window, operand 5']
    #allocation9 [shape = 'u8[1024]{0}', space=vmem, size = 0x400, scoped, tag = 'input window, operand 7']
    #allocation10 [shape = 's32[2]{0}', space=sflag, size = 0x8, scoped, tag = 'scoped memory for tpu_custom_call.1']
    #allocation11 [shape = 'u8[1024]{0}', space=vmem, size = 0x400, scoped, tag = 'input window, operand 8']
    #allocation12 [shape = 'u8[8192]{0}', space=vmem, size = 0x2000, scoped, tag = 'output window, operand 0, single buffered']
    %18 = vsyncpa [#allocation4], 0
    %19 = vsyncpa [#allocation7], 0
    %s20 = scalar_lea.sflag [#allocation7], 1
    %21 = vsyncpa %s20, 0
    %22 = vsyncpa [#allocation10], 0
    %s23 = scalar_lea.sflag [#allocation10], 1
    %24 = vsyncpa %s23, 0
    %25 = vsyncpa [#allocation5], 0
    loop: start=0, step=1, limit=4
    $region2: #{tpu_custom_call.1} parent=1 // loop_pre_header
      _
    $region3: #{tpu_custom_call.1} parent=1 // loop_header
      %s27 = sphi 0, %s31
      %p28 = scmp.ge.s32.totalorder %s27, 4
      %s34 = sphi 0, %s46
      %s35 = sphi 0, %s42
      %s36 = sphi 0, %s34
      %s37 = sphi 0, %s35
      %s38 = sphi 0, %s36
      %s39 = sphi 0, %s37
      %s49 = sphi 0, %s51
      %s52 = sphi 0, %s49
      %s53 = sphi 0, %s52
      %s69 = sphi 0, %s53
      %s75 = sphi 0, %s77
      %s78 = sphi 0, %s75
      %s79 = sphi 0, %s78
      %s95 = sphi 0, %s79
      %s101 = sphi 0, %s103
      %s104 = sphi 0, %s101
      %s105 = sphi 0, %s104
      %s121 = sphi 0, %s105
      %s127 = sphi 0, %s129
      %s130 = sphi 0, %s127
      %s131 = sphi 0, %s130
      %s147 = sphi 0, %s131
      %s153 = sphi 0, %s155
      %s156 = sphi 0, %s153
      %s157 = sphi 0, %s156
      %s173 = sphi 0, %s157
      %s179 = sphi 0, %s181
      %s182 = sphi 0, %s179
      %s183 = sphi 0, %s182
      %s199 = sphi 0, %s183
      %s205 = sphi 0, %s207
      %s208 = sphi 0, %s205
      %s209 = sphi 0, %s208
      %s225 = sphi 0, %s209
      %s231 = sphi 0, %s233
      %s234 = sphi 0, %s231
      %s235 = sphi 0, %s234
      %s251 = sphi 0, %s235
      %s257 = sphi 0, %s259
      %s260 = sphi 0, %s257
      %s261 = sphi 0, %s260
      %s277 = sphi 0, %s261
      %s283 = sphi 0, %s285
      %s286 = sphi 0, %s283
      %s287 = sphi 0, %s286
      %s303 = sphi 0, %s287
      %s309 = sphi 0, %s311
      %s312 = sphi 0, %s309
      %s313 = sphi 0, %s312
      %s329 = sphi 0, %s313
      %s335 = sphi 0, %s337
      %s338 = sphi 0, %s335
      %s339 = sphi 0, %s338
      %s355 = sphi 0, %s339
      %s361 = sphi 0, %s363
      %s364 = sphi 0, %s361
      %s365 = sphi 0, %s364
      %s381 = sphi 0, %s365
      %s387 = sphi 0, %s389
      %s390 = sphi 0, %s387
      %s391 = sphi 0, %s390
      %s407 = sphi 0, %s391
    $region4: #{tpu_custom_call.1} parent=1 // loop_header_branch
      %30 = sbr.rel (%p28) target = $region8
    $region5: #{tpu_custom_call.1} parent=1 // loop_body
      %s32 = ssub.s32 %s27, 1
      %s33 = ssub.s32 %s27, 2
      %s40 = sadd.s32 1, %s35
      %p41 = scmp.ge.s32.totalorder %s40, 2
      %s42 = scalar_select %p41, 0, %s40
      %s43 = sadd.s32 1, %s34
      %s44 = scalar_select %p41, %s43, %s34
      %p45 = scmp.ge.s32.totalorder %s44, 1
      %s46 = scalar_select %p45, 0, %s44
      %s47 = ssub.s32 %s34, %s46
      %p48 = scmp.eq.s32.totalorder %s47, 0
      %s50 = sadd.s32 %s49, 1
      %s51 = scalar_select %p48, %s49, %s50
      %p54 = pneg %p48
      %p55 = scmp.eq.s32.totalorder %s27, 1
      %p56 = por %p54, %p55
      %p57 = scmp.ne.s32.totalorder %s49, %s52
      %p58 = scmp.eq.s32.totalorder %s27, 0
      %p59 = por %p57, %p58
      %p60 = scmp.ne.s32.totalorder %s49, %s52
      %p61 = scmp.eq.s32.totalorder %s32, 1
      %p62 = por %p60, %p61
      %p63 = scmp.ne.s32.totalorder %s52, %s53
      %p64 = scmp.eq.s32.totalorder %s32, 0
      %p65 = por %p63, %p64
      %p66 = scmp.ne.s32.totalorder %s52, %s53
      %p67 = scmp.eq.s32.totalorder %s33, 1
      %p68 = por %p66, %p67
      %p70 = scmp.ne.s32.totalorder %s53, %s69
      %p71 = scmp.eq.s32.totalorder %s33, 0
      %p72 = por %p70, %p71
      %s73 = ssub.s32 %s35, %s42
      %p74 = scmp.eq.s32.totalorder %s73, 0
      %s76 = sadd.s32 %s75, 1
      %s77 = scalar_select %p74, %s75, %s76
      %p80 = pneg %p74
      %p81 = scmp.eq.s32.totalorder %s27, 1
      %p82 = por %p80, %p81
      %p83 = scmp.ne.s32.totalorder %s75, %s78
      %p84 = scmp.eq.s32.totalorder %s27, 0
      %p85 = por %p83, %p84
      %p86 = scmp.ne.s32.totalorder %s75, %s78
      %p87 = scmp.eq.s32.totalorder %s32, 1
      %p88 = por %p86, %p87
      %p89 = scmp.ne.s32.totalorder %s78, %s79
      %p90 = scmp.eq.s32.totalorder %s32, 0
      %p91 = por %p89, %p90
      %p92 = scmp.ne.s32.totalorder %s78, %s79
      %p93 = scmp.eq.s32.totalorder %s33, 1
      %p94 = por %p92, %p93
      %p96 = scmp.ne.s32.totalorder %s79, %s95
      %p97 = scmp.eq.s32.totalorder %s33, 0
      %p98 = por %p96, %p97
      %s99 = ssub.s32 %s35, %s42
      %p100 = scmp.eq.s32.totalorder %s99, 0
      %s102 = sadd.s32 %s101, 1
      %s103 = scalar_select %p100, %s101, %s102
      %p106 = pneg %p100
      %p107 = scmp.eq.s32.totalorder %s27, 1
      %p108 = por %p106, %p107
      %p109 = scmp.ne.s32.totalorder %s101, %s104
      %p110 = scmp.eq.s32.totalorder %s27, 0
      %p111 = por %p109, %p110
      %p112 = scmp.ne.s32.totalorder %s101, %s104
      %p113 = scmp.eq.s32.totalorder %s32, 1
      %p114 = por %p112, %p113
      %p115 = scmp.ne.s32.totalorder %s104, %s105
      %p116 = scmp.eq.s32.totalorder %s32, 0
      %p117 = por %p115, %p116
      %p118 = scmp.ne.s32.totalorder %s104, %s105
      %p119 = scmp.eq.s32.totalorder %s33, 1
      %p120 = por %p118, %p119
      %p122 = scmp.ne.s32.totalorder %s105, %s121
      %p123 = scmp.eq.s32.totalorder %s33, 0
      %p124 = por %p122, %p123
      %s125 = ssub.s32 %s35, %s42
      %p126 = scmp.eq.s32.totalorder %s125, 0
      %s128 = sadd.s32 %s127, 1
      %s129 = scalar_select %p126, %s127, %s128
      %p132 = pneg %p126
      %p133 = scmp.eq.s32.totalorder %s27, 1
      %p134 = por %p132, %p133
      %p135 = scmp.ne.s32.totalorder %s127, %s130
      %p136 = scmp.eq.s32.totalorder %s27, 0
      %p137 = por %p135, %p136
      %p138 = scmp.ne.s32.totalorder %s127, %s130
      %p139 = scmp.eq.s32.totalorder %s32, 1
      %p140 = por %p138, %p139
      %p141 = scmp.ne.s32.totalorder %s130, %s131
      %p142 = scmp.eq.s32.totalorder %s32, 0
      %p143 = por %p141, %p142
      %p144 = scmp.ne.s32.totalorder %s130, %s131
      %p145 = scmp.eq.s32.totalorder %s33, 1
      %p146 = por %p144, %p145
      %p148 = scmp.ne.s32.totalorder %s131, %s147
      %p149 = scmp.eq.s32.totalorder %s33, 0
      %p150 = por %p148, %p149
      %s151 = ssub.s32 %s35, %s42
      %p152 = scmp.eq.s32.totalorder %s151, 0
      %s154 = sadd.s32 %s153, 1
      %s155 = scalar_select %p152, %s153, %s154
      %p158 = pneg %p152
      %p159 = scmp.eq.s32.totalorder %s27, 1
      %p160 = por %p158, %p159
      %p161 = scmp.ne.s32.totalorder %s153, %s156
      %p162 = scmp.eq.s32.totalorder %s27, 0
      %p163 = por %p161, %p162
      %p164 = scmp.ne.s32.totalorder %s153, %s156
      %p165 = scmp.eq.s32.totalorder %s32, 1
      %p166 = por %p164, %p165
      %p167 = scmp.ne.s32.totalorder %s156, %s157
      %p168 = scmp.eq.s32.totalorder %s32, 0
      %p169 = por %p167, %p168
      %p170 = scmp.ne.s32.totalorder %s156, %s157
      %p171 = scmp.eq.s32.totalorder %s33, 1
      %p172 = por %p170, %p171
      %p174 = scmp.ne.s32.totalorder %s157, %s173
      %p175 = scmp.eq.s32.totalorder %s33, 0
      %p176 = por %p174, %p175
      %s177 = ssub.s32 %s35, %s42
      %p178 = scmp.eq.s32.totalorder %s177, 0
      %s180 = sadd.s32 %s179, 1
      %s181 = scalar_select %p178, %s179, %s180
      %p184 = pneg %p178
      %p185 = scmp.eq.s32.totalorder %s27, 1
      %p186 = por %p184, %p185
      %p187 = scmp.ne.s32.totalorder %s179, %s182
      %p188 = scmp.eq.s32.totalorder %s27, 0
      %p189 = por %p187, %p188
      %p190 = scmp.ne.s32.totalorder %s179, %s182
      %p191 = scmp.eq.s32.totalorder %s32, 1
      %p192 = por %p190, %p191
      %p193 = scmp.ne.s32.totalorder %s182, %s183
      %p194 = scmp.eq.s32.totalorder %s32, 0
      %p195 = por %p193, %p194
      %p196 = scmp.ne.s32.totalorder %s182, %s183
      %p197 = scmp.eq.s32.totalorder %s33, 1
      %p198 = por %p196, %p197
      %p200 = scmp.ne.s32.totalorder %s183, %s199
      %p201 = scmp.eq.s32.totalorder %s33, 0
      %p202 = por %p200, %p201
      %s203 = ssub.s32 %s35, %s42
      %p204 = scmp.eq.s32.totalorder %s203, 0
      %s206 = sadd.s32 %s205, 1
      %s207 = scalar_select %p204, %s205, %s206
      %p210 = pneg %p204
      %p211 = scmp.eq.s32.totalorder %s27, 1
      %p212 = por %p210, %p211
      %p213 = scmp.ne.s32.totalorder %s205, %s208
      %p214 = scmp.eq.s32.totalorder %s27, 0
      %p215 = por %p213, %p214
      %p216 = scmp.ne.s32.totalorder %s205, %s208
      %p217 = scmp.eq.s32.totalorder %s32, 1
      %p218 = por %p216, %p217
      %p219 = scmp.ne.s32.totalorder %s208, %s209
      %p220 = scmp.eq.s32.totalorder %s32, 0
      %p221 = por %p219, %p220
      %p222 = scmp.ne.s32.totalorder %s208, %s209
      %p223 = scmp.eq.s32.totalorder %s33, 1
      %p224 = por %p222, %p223
      %p226 = scmp.ne.s32.totalorder %s209, %s225
      %p227 = scmp.eq.s32.totalorder %s33, 0
      %p228 = por %p226, %p227
      %s229 = ssub.s32 %s35, %s42
      %p230 = scmp.eq.s32.totalorder %s229, 0
      %s232 = sadd.s32 %s231, 1
      %s233 = scalar_select %p230, %s231, %s232
      %p236 = pneg %p230
      %p237 = scmp.eq.s32.totalorder %s27, 1
      %p238 = por %p236, %p237
      %p239 = scmp.ne.s32.totalorder %s231, %s234
      %p240 = scmp.eq.s32.totalorder %s27, 0
      %p241 = por %p239, %p240
      %p242 = scmp.ne.s32.totalorder %s231, %s234
      %p243 = scmp.eq.s32.totalorder %s32, 1
      %p244 = por %p242, %p243
      %p245 = scmp.ne.s32.totalorder %s234, %s235
      %p246 = scmp.eq.s32.totalorder %s32, 0
      %p247 = por %p245, %p246
      %p248 = scmp.ne.s32.totalorder %s234, %s235
      %p249 = scmp.eq.s32.totalorder %s33, 1
      %p250 = por %p248, %p249
      %p252 = scmp.ne.s32.totalorder %s235, %s251
      %p253 = scmp.eq.s32.totalorder %s33, 0
      %p254 = por %p252, %p253
      %s255 = ssub.s32 %s35, %s42
      %p256 = scmp.eq.s32.totalorder %s255, 0
      %s258 = sadd.s32 %s257, 1
      %s259 = scalar_select %p256, %s257, %s258
      %p262 = pneg %p256
      %p263 = scmp.eq.s32.totalorder %s27, 1
      %p264 = por %p262, %p263
      %p265 = scmp.ne.s32.totalorder %s257, %s260
      %p266 = scmp.eq.s32.totalorder %s27, 0
      %p267 = por %p265, %p266
      %p268 = scmp.ne.s32.totalorder %s257, %s260
      %p269 = scmp.eq.s32.totalorder %s32, 1
      %p270 = por %p268, %p269
      %p271 = scmp.ne.s32.totalorder %s260, %s261
      %p272 = scmp.eq.s32.totalorder %s32, 0
      %p273 = por %p271, %p272
      %p274 = scmp.ne.s32.totalorder %s260, %s261
      %p275 = scmp.eq.s32.totalorder %s33, 1
      %p276 = por %p274, %p275
      %p278 = scmp.ne.s32.totalorder %s261, %s277
      %p279 = scmp.eq.s32.totalorder %s33, 0
      %p280 = por %p278, %p279
      %s281 = ssub.s32 %s35, %s42
      %p282 = scmp.eq.s32.totalorder %s281, 0
      %s284 = sadd.s32 %s283, 1
      %s285 = scalar_select %p282, %s283, %s284
      %p288 = pneg %p282
      %p289 = scmp.eq.s32.totalorder %s27, 1
      %p290 = por %p288, %p289
      %p291 = scmp.ne.s32.totalorder %s283, %s286
      %p292 = scmp.eq.s32.totalorder %s27, 0
      %p293 = por %p291, %p292
      %p294 = scmp.ne.s32.totalorder %s283, %s286
      %p295 = scmp.eq.s32.totalorder %s32, 1
      %p296 = por %p294, %p295
      %p297 = scmp.ne.s32.totalorder %s286, %s287
      %p298 = scmp.eq.s32.totalorder %s32, 0
      %p299 = por %p297, %p298
      %p300 = scmp.ne.s32.totalorder %s286, %s287
      %p301 = scmp.eq.s32.totalorder %s33, 1
      %p302 = por %p300, %p301
      %p304 = scmp.ne.s32.totalorder %s287, %s303
      %p305 = scmp.eq.s32.totalorder %s33, 0
      %p306 = por %p304, %p305
      %s307 = ssub.s32 %s35, %s42
      %p308 = scmp.eq.s32.totalorder %s307, 0
      %s310 = sadd.s32 %s309, 1
      %s311 = scalar_select %p308, %s309, %s310
      %p314 = pneg %p308
      %p315 = scmp.eq.s32.totalorder %s27, 1
      %p316 = por %p314, %p315
      %p317 = scmp.ne.s32.totalorder %s309, %s312
      %p318 = scmp.eq.s32.totalorder %s27, 0
      %p319 = por %p317, %p318
      %p320 = scmp.ne.s32.totalorder %s309, %s312
      %p321 = scmp.eq.s32.totalorder %s32, 1
      %p322 = por %p320, %p321
      %p323 = scmp.ne.s32.totalorder %s312, %s313
      %p324 = scmp.eq.s32.totalorder %s32, 0
      %p325 = por %p323, %p324
      %p326 = scmp.ne.s32.totalorder %s312, %s313
      %p327 = scmp.eq.s32.totalorder %s33, 1
      %p328 = por %p326, %p327
      %p330 = scmp.ne.s32.totalorder %s313, %s329
      %p331 = scmp.eq.s32.totalorder %s33, 0
      %p332 = por %p330, %p331
      %s333 = ssub.s32 %s35, %s42
      %p334 = scmp.eq.s32.totalorder %s333, 0
      %s336 = sadd.s32 %s335, 1
      %s337 = scalar_select %p334, %s335, %s336
      %p340 = pneg %p334
      %p341 = scmp.eq.s32.totalorder %s27, 1
      %p342 = por %p340, %p341
      %p343 = scmp.ne.s32.totalorder %s335, %s338
      %p344 = scmp.eq.s32.totalorder %s27, 0
      %p345 = por %p343, %p344
      %p346 = scmp.ne.s32.totalorder %s335, %s338
      %p347 = scmp.eq.s32.totalorder %s32, 1
      %p348 = por %p346, %p347
      %p349 = scmp.ne.s32.totalorder %s338, %s339
      %p350 = scmp.eq.s32.totalorder %s32, 0
      %p351 = por %p349, %p350
      %p352 = scmp.ne.s32.totalorder %s338, %s339
      %p353 = scmp.eq.s32.totalorder %s33, 1
      %p354 = por %p352, %p353
      %p356 = scmp.ne.s32.totalorder %s339, %s355
      %p357 = scmp.eq.s32.totalorder %s33, 0
      %p358 = por %p356, %p357
      %s359 = ssub.s32 %s35, %s42
      %p360 = scmp.eq.s32.totalorder %s359, 0
      %s362 = sadd.s32 %s361, 1
      %s363 = scalar_select %p360, %s361, %s362
      %p366 = pneg %p360
      %p367 = scmp.eq.s32.totalorder %s27, 1
      %p368 = por %p366, %p367
      %p369 = scmp.ne.s32.totalorder %s361, %s364
      %p370 = scmp.eq.s32.totalorder %s27, 0
      %p371 = por %p369, %p370
      %p372 = scmp.ne.s32.totalorder %s361, %s364
      %p373 = scmp.eq.s32.totalorder %s32, 1
      %p374 = por %p372, %p373
      %p375 = scmp.ne.s32.totalorder %s364, %s365
      %p376 = scmp.eq.s32.totalorder %s32, 0
      %p377 = por %p375, %p376
      %p378 = scmp.ne.s32.totalorder %s364, %s365
      %p379 = scmp.eq.s32.totalorder %s33, 1
      %p380 = por %p378, %p379
      %p382 = scmp.ne.s32.totalorder %s365, %s381
      %p383 = scmp.eq.s32.totalorder %s33, 0
      %p384 = por %p382, %p383
      %s385 = ssub.s32 %s34, %s46
      %p386 = scmp.eq.s32.totalorder %s385, 0
      %s388 = sadd.s32 %s387, 1
      %s389 = scalar_select %p386, %s387, %s388
      %p392 = pneg %p386
      %p393 = scmp.eq.s32.totalorder %s27, 1
      %p394 = por %p392, %p393
      %p395 = scmp.ne.s32.totalorder %s387, %s390
      %p396 = scmp.eq.s32.totalorder %s27, 0
      %p397 = por %p395, %p396
      %p398 = scmp.ne.s32.totalorder %s387, %s390
      %p399 = scmp.eq.s32.totalorder %s32, 1
      %p400 = por %p398, %p399
      %p401 = scmp.ne.s32.totalorder %s390, %s391
      %p402 = scmp.eq.s32.totalorder %s32, 0
      %p403 = por %p401, %p402
      %p404 = scmp.ne.s32.totalorder %s390, %s391
      %p405 = scmp.eq.s32.totalorder %s33, 1
      %p406 = por %p404, %p405
      %p408 = scmp.ne.s32.totalorder %s391, %s407
      %p409 = scmp.eq.s32.totalorder %s33, 0
      %p410 = por %p408, %p409
      %p411 = scmp.le.s32.totalorder 1, %s27
      %p412 = scmp.lt.s32.totalorder %s27, 3
      %p413 = pnand %p411, %p412
      %p414 = pneg %p413
      // Predicated region
      $region9: #{tpu_custom_call.1} parent=5 // pred_check
        _
      $region10: #{tpu_custom_call.1} parent=5 // pred_check_branch
        %416 = sbr.rel (%p413) target = $region12
      $region11: #{tpu_custom_call.1} parent=5 // pred_region
        %s417 = ssub.s32 %s27, 1
        // Predicated region
        $region13: #{tpu_custom_call.1} parent=11 // pred_check
          %p418 = pneg %p65
        $region14: #{tpu_custom_call.1} parent=11 // pred_check_branch
          %420 = sbr.rel (%p418) target = $region16
        $region15: #{tpu_custom_call.1} parent=11 // pred_region
          %s421 = smul.u32 2, %s36
          %423 = vsyncadd [#allocation4], 0
          %s424 = smul.addr %s421, 8
          %s425 = scalar_lea.hbm %s0, %s424
          %s426 = sshll.u32 %s425, 4
          %s427 = int_to_ptr.hbm [resolvable:$true] %s426
          %s428 = sshll.u32 [#allocation3], 4
          %s429 = int_to_ptr.vmem [resolvable:$true] %s428
          %434 = dma.hbm_to_vmem [thread:$0]  %s427, 256, %s429, [#allocation4], 128, 128, 8
        $region16: #{tpu_custom_call.1} parent=11 // pred_fallthru
          _
      $region12: #{tpu_custom_call.1} parent=5 // pred_fallthru
        _
      %p435 = scmp.lt.s32.totalorder %s27, 2
      // Predicated region
      $region17: #{tpu_custom_call.1} parent=5 // pred_check
        %p436 = pneg %p435
      $region18: #{tpu_custom_call.1} parent=5 // pred_check_branch
        %438 = sbr.rel (%p436) target = $region20
      $region19: #{tpu_custom_call.1} parent=5 // pred_region
        // Predicated region
        $region21: #{tpu_custom_call.1} parent=19 // pred_check
          %p439 = pneg %p85
        $region22: #{tpu_custom_call.1} parent=19 // pred_check_branch
          %441 = sbr.rel (%p439) target = $region24
        $region23: #{tpu_custom_call.1} parent=19 // pred_region
          %p442 = scmp.lt.s32.totalorder %s35, 1
          %s443 = scalar_select %p442, %s35, 1
          %s444 = smul.addr %s443, 4
          %s445 = smul.addr %s444, 8
          %s446 = scalar_lea.vmem %s1, %s445
        $region24: #{tpu_custom_call.1} parent=19 // pred_fallthru
          _
        // Predicated region
        $region25: #{tpu_custom_call.1} parent=19 // pred_check
          %p447 = pneg %p111
        $region26: #{tpu_custom_call.1} parent=19 // pred_check_branch
          %449 = sbr.rel (%p447) target = $region28
        $region27: #{tpu_custom_call.1} parent=19 // pred_region
          %s450 = sand.u32 %s27, 1
          %s451 = scalar_lea.sflag [#allocation7], %s450
          %s452 = sand.u32 %s101, 1
          %s453 = scalar_lea.vmem [#allocation6], %s452
          %455 = vsyncadd %s451, 0
          %s456 = scalar_lea.hbm %s2, %s35
          %s458 = sshll.u32 %s456, 4
          %s459 = int_to_ptr.hbm [resolvable:$true] %s458
          %s460 = sshll.u32 %s453, 4
          %s461 = int_to_ptr.vmem [resolvable:$true] %s460
          %463 = dma.hbm_to_vmem [thread:$0]  %s459, 16, %s461, %s451
        $region28: #{tpu_custom_call.1} parent=19 // pred_fallthru
          _
        // Predicated region
        $region29: #{tpu_custom_call.1} parent=19 // pred_check
          %p464 = pneg %p137
        $region30: #{tpu_custom_call.1} parent=19 // pred_check_branch
          %466 = sbr.rel (%p464) target = $region32
        $region31: #{tpu_custom_call.1} parent=19 // pred_region
          %p467 = scmp.lt.s32.totalorder %s35, 1
          %s468 = scalar_select %p467, %s35, 1
          %s469 = smul.addr %s468, 4
          %s470 = smul.addr %s469, 8
          %s471 = scalar_lea.vmem %s3, %s470
        $region32: #{tpu_custom_call.1} parent=19 // pred_fallthru
          _
        // Predicated region
        $region33: #{tpu_custom_call.1} parent=19 // pred_check
          %p472 = pneg %p163
        $region34: #{tpu_custom_call.1} parent=19 // pred_check_branch
          %474 = sbr.rel (%p472) target = $region36
        $region35: #{tpu_custom_call.1} parent=19 // pred_region
          %p475 = scmp.lt.s32.totalorder %s35, 1
          %s476 = scalar_select %p475, %s35, 1
          %s477 = scalar_lea.vmem %s4, %s476
        $region36: #{tpu_custom_call.1} parent=19 // pred_fallthru
          _
        // Predicated region
        $region37: #{tpu_custom_call.1} parent=19 // pred_check
          %p478 = pneg %p189
        $region38: #{tpu_custom_call.1} parent=19 // pred_check_branch
          %480 = sbr.rel (%p478) target = $region40
        $region39: #{tpu_custom_call.1} parent=19 // pred_region
          %s481 = sand.u32 %s27, 1
          %s482 = scalar_lea.sflag [#allocation7], %s481
          %s483 = sand.u32 %s179, 1
          %s484 = scalar_lea.vmem [#allocation8], %s483
          %486 = vsyncadd %s482, 0
          %s487 = scalar_lea.hbm %s5, %s35
          %s489 = sshll.u32 %s487, 4
          %s490 = int_to_ptr.hbm [resolvable:$true] %s489
          %s491 = sshll.u32 %s484, 4
          %s492 = int_to_ptr.vmem [resolvable:$true] %s491
          %494 = dma.hbm_to_vmem [thread:$0]  %s490, 16, %s492, %s482
        $region40: #{tpu_custom_call.1} parent=19 // pred_fallthru
          _
        // Predicated region
        $region41: #{tpu_custom_call.1} parent=19 // pred_check
          %p495 = pneg %p215
        $region42: #{tpu_custom_call.1} parent=19 // pred_check_branch
          %497 = sbr.rel (%p495) target = $region44
        $region43: #{tpu_custom_call.1} parent=19 // pred_region
          %p498 = scmp.lt.s32.totalorder %s35, 1
          %s499 = scalar_select %p498, %s35, 1
          %s500 = scalar_lea.vmem %s6, %s499
        $region44: #{tpu_custom_call.1} parent=19 // pred_fallthru
          _
        // Predicated region
        $region45: #{tpu_custom_call.1} parent=19 // pred_check
          %p501 = pneg %p241
        $region46: #{tpu_custom_call.1} parent=19 // pred_check_branch
          %503 = sbr.rel (%p501) target = $region48
        $region47: #{tpu_custom_call.1} parent=19 // pred_region
          %s504 = sand.u32 %s27, 1
          %s505 = scalar_lea.sflag [#allocation10], %s504
          %s506 = sand.u32 %s231, 1
          %s507 = scalar_lea.vmem [#allocation9], %s506
          %509 = vsyncadd %s505, 0
          %s510 = scalar_lea.hbm %s7, %s35
          %s512 = sshll.u32 %s510, 4
          %s513 = int_to_ptr.hbm [resolvable:$true] %s512
          %s514 = sshll.u32 %s507, 4
          %s515 = int_to_ptr.vmem [resolvable:$true] %s514
          %517 = dma.hbm_to_vmem [thread:$0]  %s513, 16, %s515, %s505
        $region48: #{tpu_custom_call.1} parent=19 // pred_fallthru
          _
        // Predicated region
        $region49: #{tpu_custom_call.1} parent=19 // pred_check
          %p518 = pneg %p267
        $region50: #{tpu_custom_call.1} parent=19 // pred_check_branch
          %520 = sbr.rel (%p518) target = $region52
        $region51: #{tpu_custom_call.1} parent=19 // pred_region
          %s521 = sand.u32 %s27, 1
          %s522 = scalar_lea.sflag [#allocation10], %s521
          %s523 = sand.u32 %s257, 1
          %s524 = scalar_lea.vmem [#allocation11], %s523
          %526 = vsyncadd %s522, 0
          %s527 = scalar_lea.hbm %s8, %s35
          %s529 = sshll.u32 %s527, 4
          %s530 = int_to_ptr.hbm [resolvable:$true] %s529
          %s531 = sshll.u32 %s524, 4
          %s532 = int_to_ptr.vmem [resolvable:$true] %s531
          %534 = dma.hbm_to_vmem [thread:$0]  %s530, 16, %s532, %s522
        $region52: #{tpu_custom_call.1} parent=19 // pred_fallthru
          _
        // Predicated region
        $region53: #{tpu_custom_call.1} parent=19 // pred_check
          %p535 = pneg %p293
        $region54: #{tpu_custom_call.1} parent=19 // pred_check_branch
          %537 = sbr.rel (%p535) target = $region56
        $region55: #{tpu_custom_call.1} parent=19 // pred_region
          %p538 = scmp.lt.s32.totalorder %s35, 1
          %s539 = scalar_select %p538, %s35, 1
          %s540 = smul.addr %s539, 4
          %s541 = smul.addr %s540, 8
          %s542 = scalar_lea.vmem %s9, %s541
        $region56: #{tpu_custom_call.1} parent=19 // pred_fallthru
          _
        // Predicated region
        $region57: #{tpu_custom_call.1} parent=19 // pred_check
          %p543 = pneg %p319
        $region58: #{tpu_custom_call.1} parent=19 // pred_check_branch
          %545 = sbr.rel (%p543) target = $region60
        $region59: #{tpu_custom_call.1} parent=19 // pred_region
          %p546 = scmp.lt.s32.totalorder %s35, 1
          %s547 = scalar_select %p546, %s35, 1
          %s548 = scalar_lea.vmem %s10, %s547
        $region60: #{tpu_custom_call.1} parent=19 // pred_fallthru
          _
        // Predicated region
        $region61: #{tpu_custom_call.1} parent=19 // pred_check
          %p549 = pneg %p345
        $region62: #{tpu_custom_call.1} parent=19 // pred_check_branch
          %551 = sbr.rel (%p549) target = $region64
        $region63: #{tpu_custom_call.1} parent=19 // pred_region
          %p552 = scmp.lt.s32.totalorder %s35, 1
          %s553 = scalar_select %p552, %s35, 1
          %s554 = smul.addr %s553, 8
          %s555 = smul.addr %s554, 8
          %s556 = scalar_lea.vmem %s11, %s555
        $region64: #{tpu_custom_call.1} parent=19 // pred_fallthru
          _
        // Predicated region
        $region65: #{tpu_custom_call.1} parent=19 // pred_check
          %p557 = pneg %p371
        $region66: #{tpu_custom_call.1} parent=19 // pred_check_branch
          %559 = sbr.rel (%p557) target = $region68
        $region67: #{tpu_custom_call.1} parent=19 // pred_region
          %p560 = scmp.lt.s32.totalorder %s35, 1
          %s561 = scalar_select %p560, %s35, 1
          %s562 = scalar_lea.vmem %s12, %s561
        $region68: #{tpu_custom_call.1} parent=19 // pred_fallthru
          _
      $region20: #{tpu_custom_call.1} parent=5 // pred_fallthru
        _
      %p563 = scmp.le.s32.totalorder 1, %s27
      %p564 = scmp.lt.s32.totalorder %s27, 3
      %p565 = pnand %p563, %p564
      %p566 = pneg %p565
      // Predicated region
      $region69: #{tpu_custom_call.1} parent=5 // pred_check
        _
      $region70: #{tpu_custom_call.1} parent=5 // pred_check_branch
        %568 = sbr.rel (%p565) target = $region72
      $region71: #{tpu_custom_call.1} parent=5 // pred_region
        %s569 = ssub.s32 %s27, 1
        // Predicated region
        $region73: #{tpu_custom_call.1} parent=71 // pred_check
          %p570 = pneg %p65
        $region74: #{tpu_custom_call.1} parent=71 // pred_check_branch
          %572 = sbr.rel (%p570) target = $region76
        $region75: #{tpu_custom_call.1} parent=71 // pred_region
          %574 = dma.done [#allocation4], 256
        $region76: #{tpu_custom_call.1} parent=71 // pred_fallthru
          _
        %s575 = sand.u32 %s32, 1
        %s576 = scalar_lea.sflag [#allocation7], %s575
        %s577 = sand.u32 %s104, 1
        %s578 = scalar_lea.vmem [#allocation6], %s577
        // Predicated region
        $region77: #{tpu_custom_call.1} parent=71 // pred_check
          %p579 = pneg %p117
        $region78: #{tpu_custom_call.1} parent=71 // pred_check_branch
          %581 = sbr.rel (%p579) target = $region80
        $region79: #{tpu_custom_call.1} parent=71 // pred_region
          %583 = dma.done %s576, 16
        $region80: #{tpu_custom_call.1} parent=71 // pred_fallthru
          _
        %s584 = sand.u32 %s32, 1
        %s585 = scalar_lea.sflag [#allocation7], %s584
        %s586 = sand.u32 %s182, 1
        %s587 = scalar_lea.vmem [#allocation8], %s586
        // Predicated region
        $region81: #{tpu_custom_call.1} parent=71 // pred_check
          %p588 = pneg %p195
        $region82: #{tpu_custom_call.1} parent=71 // pred_check_branch
          %590 = sbr.rel (%p588) target = $region84
        $region83: #{tpu_custom_call.1} parent=71 // pred_region
          %592 = dma.done %s585, 16
        $region84: #{tpu_custom_call.1} parent=71 // pred_fallthru
          _
        %s593 = sand.u32 %s32, 1
        %s594 = scalar_lea.sflag [#allocation10], %s593
        %s595 = sand.u32 %s234, 1
        %s596 = scalar_lea.vmem [#allocation9], %s595
        // Predicated region
        $region85: #{tpu_custom_call.1} parent=71 // pred_check
          %p597 = pneg %p247
        $region86: #{tpu_custom_call.1} parent=71 // pred_check_branch
          %599 = sbr.rel (%p597) target = $region88
        $region87: #{tpu_custom_call.1} parent=71 // pred_region
          %601 = dma.done %s594, 16
        $region88: #{tpu_custom_call.1} parent=71 // pred_fallthru
          _
        %s602 = sand.u32 %s32, 1
        %s603 = scalar_lea.sflag [#allocation10], %s602
        %s604 = sand.u32 %s260, 1
        %s605 = scalar_lea.vmem [#allocation11], %s604
        // Predicated region
        $region89: #{tpu_custom_call.1} parent=71 // pred_check
          %p606 = pneg %p273
        $region90: #{tpu_custom_call.1} parent=71 // pred_check_branch
          %608 = sbr.rel (%p606) target = $region92
        $region91: #{tpu_custom_call.1} parent=71 // pred_region
          %610 = dma.done %s603, 16
        $region92: #{tpu_custom_call.1} parent=71 // pred_fallthru
          _
        %p611 = pneg %p65
        %p612 = pneg %p62
        %p613 = scmp.lt.s32.totalorder %s37, 1
        %s614 = scalar_select %p613, %s37, 1
        %s615 = smul.addr %s614, 4
        %s616 = smul.addr %s615, 8
        %s617 = scalar_lea.vmem %s1, %s616
        %p618 = pneg %p91
        %p619 = pneg %p88
        %s620 = sand.u32 %s32, 1
        %s621 = scalar_lea.sflag [#allocation7], %s620
        %s622 = sand.u32 %s104, 1
        %s623 = scalar_lea.vmem [#allocation6], %s622
        %p624 = pneg %p117
        %p625 = pneg %p114
        %p626 = scmp.lt.s32.totalorder %s37, 1
        %s627 = scalar_select %p626, %s37, 1
        %s628 = smul.addr %s627, 4
        %s629 = smul.addr %s628, 8
        %s630 = scalar_lea.vmem %s3, %s629
        %p631 = pneg %p143
        %p632 = pneg %p140
        %p633 = scmp.lt.s32.totalorder %s37, 1
        %s634 = scalar_select %p633, %s37, 1
        %s635 = scalar_lea.vmem %s4, %s634
        %p636 = pneg %p169
        %p637 = pneg %p166
        %s638 = sand.u32 %s32, 1
        %s639 = scalar_lea.sflag [#allocation7], %s638
        %s640 = sand.u32 %s182, 1
        %s641 = scalar_lea.vmem [#allocation8], %s640
        %p642 = pneg %p195
        %p643 = pneg %p192
        %p644 = scmp.lt.s32.totalorder %s37, 1
        %s645 = scalar_select %p644, %s37, 1
        %s646 = scalar_lea.vmem %s6, %s645
        %p647 = pneg %p221
        %p648 = pneg %p218
        %s649 = sand.u32 %s32, 1
        %s650 = scalar_lea.sflag [#allocation10], %s649
        %s651 = sand.u32 %s234, 1
        %s652 = scalar_lea.vmem [#allocation9], %s651
        %p653 = pneg %p247
        %p654 = pneg %p244
        %s655 = sand.u32 %s32, 1
        %s656 = scalar_lea.sflag [#allocation10], %s655
        %s657 = sand.u32 %s260, 1
        %s658 = scalar_lea.vmem [#allocation11], %s657
        %p659 = pneg %p273
        %p660 = pneg %p270
        %p661 = scmp.lt.s32.totalorder %s37, 1
        %s662 = scalar_select %p661, %s37, 1
        %s663 = smul.addr %s662, 4
        %s664 = smul.addr %s663, 8
        %s665 = scalar_lea.vmem %s9, %s664
        %p666 = pneg %p299
        %p667 = pneg %p296
        %p668 = scmp.lt.s32.totalorder %s37, 1
        %s669 = scalar_select %p668, %s37, 1
        %s670 = scalar_lea.vmem %s10, %s669
        %p671 = pneg %p325
        %p672 = pneg %p322
        %p673 = scmp.lt.s32.totalorder %s37, 1
        %s674 = scalar_select %p673, %s37, 1
        %s675 = smul.addr %s674, 8
        %s676 = smul.addr %s675, 8
        %s677 = scalar_lea.vmem %s11, %s676
        %p678 = pneg %p351
        %p679 = pneg %p348
        %p680 = scmp.lt.s32.totalorder %s37, 1
        %s681 = scalar_select %p680, %s37, 1
        %s682 = scalar_lea.vmem %s12, %s681
        %p683 = pneg %p377
        %p684 = pneg %p374
        %p685 = pneg %p403
        %p686 = pneg %p400
        %s687 = smul.u32 2, %s36
        %p688 = scmp.lt.s32.totalorder %s37, 1
        %s689 = scalar_select %p688, %s37, 1
        %s690 = smul.addr %s689, 4
        %s691 = smul.addr %s690, 8
        %s692 = scalar_lea.vmem %s1, %s691
        %p693 = scmp.lt.s32.totalorder %s37, 1
        %s694 = scalar_select %p693, %s37, 1
        %s695 = smul.addr %s694, 4
        %s696 = smul.addr %s695, 8
        %s697 = scalar_lea.vmem %s3, %s696
        %p698 = scmp.lt.s32.totalorder %s37, 1
        %s699 = scalar_select %p698, %s37, 1
        %s700 = scalar_lea.vmem %s4, %s699
        %p701 = scmp.lt.s32.totalorder %s37, 1
        %s702 = scalar_select %p701, %s37, 1
        %s703 = scalar_lea.vmem %s6, %s702
        %p704 = scmp.lt.s32.totalorder %s37, 1
        %s705 = scalar_select %p704, %s37, 1
        %s706 = smul.addr %s705, 4
        %s707 = smul.addr %s706, 8
        %s708 = scalar_lea.vmem %s9, %s707
        %p709 = scmp.lt.s32.totalorder %s37, 1
        %s710 = scalar_select %p709, %s37, 1
        %s711 = scalar_lea.vmem %s10, %s710
        %p712 = scmp.lt.s32.totalorder %s37, 1
        %s713 = scalar_select %p712, %s37, 1
        %s714 = smul.addr %s713, 8
        %s715 = smul.addr %s714, 8
        %s716 = scalar_lea.vmem %s11, %s715
        %p717 = scmp.lt.s32.totalorder %s37, 1
        %s718 = scalar_select %p717, %s37, 1
        %s719 = scalar_lea.vmem %s12, %s718
        %s720 = smul.u32 2, %s36
        %p721 = scmp.eq.s32.totalorder %s37, 0
        // Predicated region
        $region93: #{tpu_custom_call.1} parent=71 // pred_check
          %p722 = pneg %p721
        $region94: #{tpu_custom_call.1} parent=71 // pred_check_branch
          %724 = sbr.rel (%p722) target = $region96
        $region95: #{tpu_custom_call.1} parent=71 // pred_region
          %v725 = vld [vmem:[#allocation3] sm:$0xff]
          %v726 = vld [vmem:[#allocation3 + $0x8] sm:$0xff]
          %vm727 = vcmask 261120
          %728 = vst.msk [vmem:[#allocation2] sm:$0xff] %vm727, %v725
          %729 = vst.msk [vmem:[#allocation2 + $0x8] sm:$0xff] %vm727, %v726
        $region96: #{tpu_custom_call.1} parent=71 // pred_fallthru
          _
        %v730 = vld [vmem:[#allocation2] sm:$0xff]
        %v731 = vld [vmem:[#allocation2 + $0x8] sm:$0xff]
        %v732 = vld [vmem:[%s692] sm:$0xff]
        %v733 = vld [vmem:[%s692 + $0x8] sm:$0xff]
        %v734 = vld [vmem:[%s692 + $0x10] sm:$0xff]
        %v735 = vld [vmem:[%s692 + $0x18] sm:$0xff]
        %v736 = vld [vmem:[%s578] sm:$0x1]
        %v738 = vperm.slane %v736, 0
        %vm740 = vcmask 261120
        %v742 = vsel %vm740, %v730, 0
        %v745 = vsel %vm740, %v731, 0
        %747 = vmatpush.msra.mxu0 0.0
        %748 = vmatpush.msra.mxu0 0.0
        %749 = vmatpush.msra.mxu0 0.0
        %750 = vmatpush.msra.mxu0 0.0
        %751 = vmatpush.msra.mxu0 0.0
        %752 = vmatpush.msra.mxu0 0.0
        %753 = vmatpush.msra.mxu0 0.0
        %754 = vmatpush.msra.mxu0 0.0
        %755 = vmatpush.msra.mxu0 0.0
        %756 = vmatpush.msra.mxu0 0.0
        %757 = vmatpush.msra.mxu0 0.0
        %758 = vmatpush.msra.mxu0 0.0
        %759 = vmatpush.msra.mxu0 %v735
        %760 = vmatpush.msra.mxu0 %v734
        %761 = vmatpush.msra.mxu0 %v733
        %762 = vmatpush.msra.mxu0 %v732
        %763 = vmatmul.f32.gmra.mxu0 %v742
        %v764 = vpop.f32.mrf.mxu0
        %v765 = vadd.f32 %v738, %v764
        %766 = vmatmul.f32.gmra.mxu0 %v745
        %v767 = vpop.f32.mrf.mxu0
        %v768 = vadd.f32 %v738, %v767
        %769 = vdwg.mxu0
        %v770 = vld [vmem:[%s697] sm:$0xff]
        %v771 = vld [vmem:[%s697 + $0x8] sm:$0xff]
        %v772 = vld [vmem:[%s697 + $0x10] sm:$0xff]
        %v773 = vld [vmem:[%s697 + $0x18] sm:$0xff]
        %775 = vrot.lane.b32.xlu0 %v765, 96
        %v776 = vpop.permute.xlu0 %775
        %vm777 = vcmask 64512
        %v778 = vsel %vm777, %v765, 0
        %v780 = vsel %vm777, %v776, 0
        %782 = vmatpush.xpose.msra.mxu0 0.0
        %783 = vmatpush.xpose.msra.mxu0 0.0
        %784 = vmatpush.xpose.msra.mxu0 0.0
        %785 = vmatpush.xpose.msra.mxu0 0.0
        %786 = vmatpush.xpose.msra.mxu0 0.0
        %787 = vmatpush.xpose.msra.mxu0 0.0
        %788 = vmatpush.xpose.msra.mxu0 0.0
        %789 = vmatpush.xpose.msra.mxu0 0.0
        %790 = vmatpush.xpose.msra.mxu0 0.0
        %791 = vmatpush.xpose.msra.mxu0 0.0
        %792 = vmatpush.xpose.msra.mxu0 0.0
        %793 = vmatpush.xpose.msra.mxu0 0.0
        %794 = vmatpush.xpose.msra.mxu0 0.0
        %795 = vmatpush.xpose.msra.mxu0 0.0
        %796 = vmatpush.xpose.msra.mxu0 0.0
        %797 = vmatpush.xpose.msra.mxu0 %v780
        %798 = vmatmul.f32.gmra.mxu0 %v778
        %v799 = vpop.f32.mrf.mxu0
        %v800 = vadd.f32 0.0, %v799
        %801 = vdwg.mxu0
        %803 = vrot.lane.b32.xlu0 %v768, 96
        %v804 = vpop.permute.xlu0 %803
        %v805 = vsel %vm777, %v768, 0
        %v807 = vsel %vm777, %v804, 0
        %809 = vmatpush.xpose.msra.mxu0 0.0
        %810 = vmatpush.xpose.msra.mxu0 0.0
        %811 = vmatpush.xpose.msra.mxu0 0.0
        %812 = vmatpush.xpose.msra.mxu0 0.0
        %813 = vmatpush.xpose.msra.mxu0 0.0
        %814 = vmatpush.xpose.msra.mxu0 0.0
        %815 = vmatpush.xpose.msra.mxu0 0.0
        %816 = vmatpush.xpose.msra.mxu0 0.0
        %817 = vmatpush.xpose.msra.mxu0 0.0
        %818 = vmatpush.xpose.msra.mxu0 0.0
        %819 = vmatpush.xpose.msra.mxu0 0.0
        %820 = vmatpush.xpose.msra.mxu0 0.0
        %821 = vmatpush.xpose.msra.mxu0 0.0
        %822 = vmatpush.xpose.msra.mxu0 0.0
        %823 = vmatpush.xpose.msra.mxu0 0.0
        %824 = vmatpush.xpose.msra.mxu0 %v807
        %825 = vmatmul.f32.gmra.mxu0 %v805
        %v826 = vpop.f32.mrf.mxu0
        %v827 = vadd.f32 0.0, %v826
        %828 = vdwg.mxu0
        %v829 = vsel %vm777, %v800, -inf
        %830 = vmax.xlane.f32.xlu0 %v829
        %v831 = vpop.xlane.xlu0 %830
        %v832 = vsel %vm777, %v827, -inf
        %833 = vmax.xlane.f32.xlu0 %v832
        %v834 = vpop.xlane.xlu0 %833
        %v835 = vsub.f32 %v800, %v831
        %v836 = vsub.f32 %v827, %v834
        %v837 = vmul.f32 %v835, 1.442695
        %v838 = vpow.pop %v837
        %v839 = vmul.f32 %v836, 1.442695
        %v840 = vpow.pop %v839
        %v841 = vsel %vm777, %v838, 0.0
        %842 = vadd.xlane.f32.xlu0 %v841
        %v843 = vpop.xlane.xlu0 %842
        %v844 = vsel %vm777, %v840, 0.0
        %845 = vadd.xlane.f32.xlu0 %v844
        %v846 = vpop.xlane.xlu0 %845
        %v847 = vrcp.pop %v843
        %v848 = vrcp.pop %v846
        %v849 = vmul.f32 %v838, %v847
        %v850 = vmul.f32 %v840, %v848
        %851 = vrot.lane.b32.xlu0 %v765, 64
        %v852 = vpop.permute.xlu0 %851
        %v855 = vsel %vm777, %v849, 0
        %857 = vmatpush.msra.mxu0 0.0
        %858 = vmatpush.msra.mxu0 0.0
        %859 = vmatpush.msra.mxu0 0.0
        %860 = vmatpush.msra.mxu0 0.0
        %861 = vmatpush.msra.mxu0 0.0
        %862 = vmatpush.msra.mxu0 0.0
        %863 = vmatpush.msra.mxu0 0.0
        %864 = vmatpush.msra.mxu0 0.0
        %865 = vmatpush.msra.mxu0 0.0
        %866 = vmatpush.msra.mxu0 0.0
        %867 = vmatpush.msra.mxu0 0.0
        %868 = vmatpush.msra.mxu0 0.0
        %869 = vmatpush.msra.mxu0 0.0
        %870 = vmatpush.msra.mxu0 0.0
        %871 = vmatpush.msra.mxu0 0.0
        %872 = vmatpush.msra.mxu0 %v852
        %873 = vmatmul.f32.gmra.mxu0 %v855
        %v874 = vpop.f32.mrf.mxu0
        %v875 = vadd.f32 0.0, %v874
        %876 = vdwg.mxu0
        %877 = vrot.lane.b32.xlu0 %v768, 64
        %v878 = vpop.permute.xlu0 %877
        %v881 = vsel %vm777, %v850, 0
        %883 = vmatpush.msra.mxu0 0.0
        %884 = vmatpush.msra.mxu0 0.0
        %885 = vmatpush.msra.mxu0 0.0
        %886 = vmatpush.msra.mxu0 0.0
        %887 = vmatpush.msra.mxu0 0.0
        %888 = vmatpush.msra.mxu0 0.0
        %889 = vmatpush.msra.mxu0 0.0
        %890 = vmatpush.msra.mxu0 0.0
        %891 = vmatpush.msra.mxu0 0.0
        %892 = vmatpush.msra.mxu0 0.0
        %893 = vmatpush.msra.mxu0 0.0
        %894 = vmatpush.msra.mxu0 0.0
        %895 = vmatpush.msra.mxu0 0.0
        %896 = vmatpush.msra.mxu0 0.0
        %897 = vmatpush.msra.mxu0 0.0
        %898 = vmatpush.msra.mxu0 %v878
        %899 = vmatmul.f32.gmra.mxu0 %v881
        %v900 = vpop.f32.mrf.mxu0
        %v901 = vadd.f32 0.0, %v900
        %902 = vdwg.mxu0
        %903 = vrot.lane.b32.xlu0 %v765, 120
        %v904 = vpop.permute.xlu0 %903
        %905 = vrot.lane.b32.xlu0 %v765, 88
        %v906 = vpop.permute.xlu0 %905
        %v907 = vsel %vm777, %v904, 0
        %v909 = vsel %vm777, %v906, 0
        %911 = vmatpush.xpose.msra.mxu0 0.0
        %912 = vmatpush.xpose.msra.mxu0 0.0
        %913 = vmatpush.xpose.msra.mxu0 0.0
        %914 = vmatpush.xpose.msra.mxu0 0.0
        %915 = vmatpush.xpose.msra.mxu0 0.0
        %916 = vmatpush.xpose.msra.mxu0 0.0
        %917 = vmatpush.xpose.msra.mxu0 0.0
        %918 = vmatpush.xpose.msra.mxu0 0.0
        %919 = vmatpush.xpose.msra.mxu0 0.0
        %920 = vmatpush.xpose.msra.mxu0 0.0
        %921 = vmatpush.xpose.msra.mxu0 0.0
        %922 = vmatpush.xpose.msra.mxu0 0.0
        %923 = vmatpush.xpose.msra.mxu0 0.0
        %924 = vmatpush.xpose.msra.mxu0 0.0
        %925 = vmatpush.xpose.msra.mxu0 0.0
        %926 = vmatpush.xpose.msra.mxu0 %v909
        %927 = vmatmul.f32.gmra.mxu0 %v907
        %v928 = vpop.f32.mrf.mxu0
        %v929 = vadd.f32 0.0, %v928
        %930 = vdwg.mxu0
        %931 = vrot.lane.b32.xlu0 %v768, 120
        %v932 = vpop.permute.xlu0 %931
        %933 = vrot.lane.b32.xlu0 %v768, 88
        %v934 = vpop.permute.xlu0 %933
        %v935 = vsel %vm777, %v932, 0
        %v937 = vsel %vm777, %v934, 0
        %939 = vmatpush.xpose.msra.mxu0 0.0
        %940 = vmatpush.xpose.msra.mxu0 0.0
        %941 = vmatpush.xpose.msra.mxu0 0.0
        %942 = vmatpush.xpose.msra.mxu0 0.0
        %943 = vmatpush.xpose.msra.mxu0 0.0
        %944 = vmatpush.xpose.msra.mxu0 0.0
        %945 = vmatpush.xpose.msra.mxu0 0.0
        %946 = vmatpush.xpose.msra.mxu0 0.0
        %947 = vmatpush.xpose.msra.mxu0 0.0
        %948 = vmatpush.xpose.msra.mxu0 0.0
        %949 = vmatpush.xpose.msra.mxu0 0.0
        %950 = vmatpush.xpose.msra.mxu0 0.0
        %951 = vmatpush.xpose.msra.mxu0 0.0
        %952 = vmatpush.xpose.msra.mxu0 0.0
        %953 = vmatpush.xpose.msra.mxu0 0.0
        %954 = vmatpush.xpose.msra.mxu0 %v937
        %955 = vmatmul.f32.gmra.mxu0 %v935
        %v956 = vpop.f32.mrf.mxu0
        %v957 = vadd.f32 0.0, %v956
        %958 = vdwg.mxu0
        %v959 = vsel %vm777, %v929, -inf
        %960 = vmax.xlane.f32.xlu0 %v959
        %v961 = vpop.xlane.xlu0 %960
        %v962 = vsel %vm777, %v957, -inf
        %963 = vmax.xlane.f32.xlu0 %v962
        %v964 = vpop.xlane.xlu0 %963
        %v965 = vsub.f32 %v929, %v961
        %v966 = vsub.f32 %v957, %v964
        %v967 = vmul.f32 %v965, 1.442695
        %v968 = vpow.pop %v967
        %v969 = vmul.f32 %v966, 1.442695
        %v970 = vpow.pop %v969
        %v971 = vsel %vm777, %v968, 0.0
        %972 = vadd.xlane.f32.xlu0 %v971
        %v973 = vpop.xlane.xlu0 %972
        %v974 = vsel %vm777, %v970, 0.0
        %975 = vadd.xlane.f32.xlu0 %v974
        %v976 = vpop.xlane.xlu0 %975
        %v977 = vrcp.pop %v973
        %v978 = vrcp.pop %v976
        %v979 = vmul.f32 %v968, %v977
        %v980 = vmul.f32 %v970, %v978
        %981 = vrot.lane.b32.xlu0 %v765, 56
        %v982 = vpop.permute.xlu0 %981
        %v985 = vsel %vm777, %v979, 0
        %987 = vmatpush.msra.mxu0 0.0
        %988 = vmatpush.msra.mxu0 0.0
        %989 = vmatpush.msra.mxu0 0.0
        %990 = vmatpush.msra.mxu0 0.0
        %991 = vmatpush.msra.mxu0 0.0
        %992 = vmatpush.msra.mxu0 0.0
        %993 = vmatpush.msra.mxu0 0.0
        %994 = vmatpush.msra.mxu0 0.0
        %995 = vmatpush.msra.mxu0 0.0
        %996 = vmatpush.msra.mxu0 0.0
        %997 = vmatpush.msra.mxu0 0.0
        %998 = vmatpush.msra.mxu0 0.0
        %999 = vmatpush.msra.mxu0 0.0
        %1000 = vmatpush.msra.mxu0 0.0
        %1001 = vmatpush.msra.mxu0 0.0
        %1002 = vmatpush.msra.mxu0 %v982
        %1003 = vmatmul.f32.gmra.mxu0 %v985
        %v1004 = vpop.f32.mrf.mxu0
        %v1005 = vadd.f32 0.0, %v1004
        %1006 = vdwg.mxu0
        %1007 = vrot.lane.b32.xlu0 %v768, 56
        %v1008 = vpop.permute.xlu0 %1007
        %v1011 = vsel %vm777, %v980, 0
        %1013 = vmatpush.msra.mxu0 0.0
        %1014 = vmatpush.msra.mxu0 0.0
        %1015 = vmatpush.msra.mxu0 0.0
        %1016 = vmatpush.msra.mxu0 0.0
        %1017 = vmatpush.msra.mxu0 0.0
        %1018 = vmatpush.msra.mxu0 0.0
        %1019 = vmatpush.msra.mxu0 0.0
        %1020 = vmatpush.msra.mxu0 0.0
        %1021 = vmatpush.msra.mxu0 0.0
        %1022 = vmatpush.msra.mxu0 0.0
        %1023 = vmatpush.msra.mxu0 0.0
        %1024 = vmatpush.msra.mxu0 0.0
        %1025 = vmatpush.msra.mxu0 0.0
        %1026 = vmatpush.msra.mxu0 0.0
        %1027 = vmatpush.msra.mxu0 0.0
        %1028 = vmatpush.msra.mxu0 %v1008
        %1029 = vmatmul.f32.gmra.mxu0 %v1011
        %v1030 = vpop.f32.mrf.mxu0
        %v1031 = vadd.f32 0.0, %v1030
        %1032 = vdwg.mxu0
        %v1034 = vsel %vm777, %v1005, 0
        %v1037 = vsel %vm777, %v1031, 0
        %1039 = vmatpush.msra.mxu0 0.0
        %1040 = vmatpush.msra.mxu0 0.0
        %1041 = vmatpush.msra.mxu0 0.0
        %1042 = vmatpush.msra.mxu0 0.0
        %1043 = vmatpush.msra.mxu0 0.0
        %1044 = vmatpush.msra.mxu0 0.0
        %1045 = vmatpush.msra.mxu0 0.0
        %1046 = vmatpush.msra.mxu0 0.0
        %1047 = vmatpush.msra.mxu0 0.0
        %1048 = vmatpush.msra.mxu0 0.0
        %1049 = vmatpush.msra.mxu0 0.0
        %1050 = vmatpush.msra.mxu0 0.0
        %1051 = vmatpush.msra.mxu0 0.0
        %1052 = vmatpush.msra.mxu0 0.0
        %1053 = vmatpush.msra.mxu0 0.0
        %1054 = vmatpush.msra.mxu0 %v771
        %1055 = vmatmul.f32.gmra.mxu0 %v1034
        %v1056 = vpop.f32.mrf.mxu0
        %v1057 = vadd.f32 0.0, %v1056
        %1058 = vmatmul.f32.gmra.mxu0 %v1037
        %v1059 = vpop.f32.mrf.mxu0
        %v1060 = vadd.f32 0.0, %v1059
        %1061 = vdwg.mxu0
        %v1063 = vsel %vm777, %v875, 0
        %v1066 = vsel %vm777, %v901, 0
        %1068 = vmatpush.msra.mxu0 0.0
        %1069 = vmatpush.msra.mxu0 0.0
        %1070 = vmatpush.msra.mxu0 0.0
        %1071 = vmatpush.msra.mxu0 0.0
        %1072 = vmatpush.msra.mxu0 0.0
        %1073 = vmatpush.msra.mxu0 0.0
        %1074 = vmatpush.msra.mxu0 0.0
        %1075 = vmatpush.msra.mxu0 0.0
        %1076 = vmatpush.msra.mxu0 0.0
        %1077 = vmatpush.msra.mxu0 0.0
        %1078 = vmatpush.msra.mxu0 0.0
        %1079 = vmatpush.msra.mxu0 0.0
        %1080 = vmatpush.msra.mxu0 0.0
        %1081 = vmatpush.msra.mxu0 0.0
        %1082 = vmatpush.msra.mxu0 0.0
        %1083 = vmatpush.msra.mxu0 %v770
        %1084 = vmatmul.f32.gmra.mxu0 %v1063
        %v1085 = vpop.f32.mrf.mxu0
        %v1086 = vadd.f32 %v1057, %v1085
        %1087 = vmatmul.f32.gmra.mxu0 %v1066
        %v1088 = vpop.f32.mrf.mxu0
        %v1089 = vadd.f32 %v1060, %v1088
        %1090 = vdwg.mxu0
        %1091 = vrot.lane.b32.xlu0 %v765, 112
        %v1092 = vpop.permute.xlu0 %1091
        %1093 = vrot.lane.b32.xlu0 %v765, 80
        %v1094 = vpop.permute.xlu0 %1093
        %v1095 = vsel %vm777, %v1092, 0
        %v1097 = vsel %vm777, %v1094, 0
        %1099 = vmatpush.xpose.msra.mxu0 0.0
        %1100 = vmatpush.xpose.msra.mxu0 0.0
        %1101 = vmatpush.xpose.msra.mxu0 0.0
        %1102 = vmatpush.xpose.msra.mxu0 0.0
        %1103 = vmatpush.xpose.msra.mxu0 0.0
        %1104 = vmatpush.xpose.msra.mxu0 0.0
        %1105 = vmatpush.xpose.msra.mxu0 0.0
        %1106 = vmatpush.xpose.msra.mxu0 0.0
        %1107 = vmatpush.xpose.msra.mxu0 0.0
        %1108 = vmatpush.xpose.msra.mxu0 0.0
        %1109 = vmatpush.xpose.msra.mxu0 0.0
        %1110 = vmatpush.xpose.msra.mxu0 0.0
        %1111 = vmatpush.xpose.msra.mxu0 0.0
        %1112 = vmatpush.xpose.msra.mxu0 0.0
        %1113 = vmatpush.xpose.msra.mxu0 0.0
        %1114 = vmatpush.xpose.msra.mxu0 %v1097
        %1115 = vmatmul.f32.gmra.mxu0 %v1095
        %v1116 = vpop.f32.mrf.mxu0
        %v1117 = vadd.f32 0.0, %v1116
        %1118 = vdwg.mxu0
        %1119 = vrot.lane.b32.xlu0 %v768, 112
        %v1120 = vpop.permute.xlu0 %1119
        %1121 = vrot.lane.b32.xlu0 %v768, 80
        %v1122 = vpop.permute.xlu0 %1121
        %v1123 = vsel %vm777, %v1120, 0
        %v1125 = vsel %vm777, %v1122, 0
        %1127 = vmatpush.xpose.msra.mxu0 0.0
        %1128 = vmatpush.xpose.msra.mxu0 0.0
        %1129 = vmatpush.xpose.msra.mxu0 0.0
        %1130 = vmatpush.xpose.msra.mxu0 0.0
        %1131 = vmatpush.xpose.msra.mxu0 0.0
        %1132 = vmatpush.xpose.msra.mxu0 0.0
        %1133 = vmatpush.xpose.msra.mxu0 0.0
        %1134 = vmatpush.xpose.msra.mxu0 0.0
        %1135 = vmatpush.xpose.msra.mxu0 0.0
        %1136 = vmatpush.xpose.msra.mxu0 0.0
        %1137 = vmatpush.xpose.msra.mxu0 0.0
        %1138 = vmatpush.xpose.msra.mxu0 0.0
        %1139 = vmatpush.xpose.msra.mxu0 0.0
        %1140 = vmatpush.xpose.msra.mxu0 0.0
        %1141 = vmatpush.xpose.msra.mxu0 0.0
        %1142 = vmatpush.xpose.msra.mxu0 %v1125
        %1143 = vmatmul.f32.gmra.mxu0 %v1123
        %v1144 = vpop.f32.mrf.mxu0
        %v1145 = vadd.f32 0.0, %v1144
        %1146 = vdwg.mxu0
        %v1147 = vsel %vm777, %v1117, -inf
        %1148 = vmax.xlane.f32.xlu0 %v1147
        %v1149 = vpop.xlane.xlu0 %1148
        %v1150 = vsel %vm777, %v1145, -inf
        %1151 = vmax.xlane.f32.xlu0 %v1150
        %v1152 = vpop.xlane.xlu0 %1151
        %v1153 = vsub.f32 %v1117, %v1149
        %v1154 = vsub.f32 %v1145, %v1152
        %v1155 = vmul.f32 %v1153, 1.442695
        %v1156 = vpow.pop %v1155
        %v1157 = vmul.f32 %v1154, 1.442695
        %v1158 = vpow.pop %v1157
        %v1159 = vsel %vm777, %v1156, 0.0
        %1160 = vadd.xlane.f32.xlu0 %v1159
        %v1161 = vpop.xlane.xlu0 %1160
        %v1162 = vsel %vm777, %v1158, 0.0
        %1163 = vadd.xlane.f32.xlu0 %v1162
        %v1164 = vpop.xlane.xlu0 %1163
        %v1165 = vrcp.pop %v1161
        %v1166 = vrcp.pop %v1164
        %v1167 = vmul.f32 %v1156, %v1165
        %v1168 = vmul.f32 %v1158, %v1166
        %1169 = vrot.lane.b32.xlu0 %v765, 48
        %v1170 = vpop.permute.xlu0 %1169
        %v1173 = vsel %vm777, %v1167, 0
        %1175 = vmatpush.msra.mxu0 0.0
        %1176 = vmatpush.msra.mxu0 0.0
        %1177 = vmatpush.msra.mxu0 0.0
        %1178 = vmatpush.msra.mxu0 0.0
        %1179 = vmatpush.msra.mxu0 0.0
        %1180 = vmatpush.msra.mxu0 0.0
        %1181 = vmatpush.msra.mxu0 0.0
        %1182 = vmatpush.msra.mxu0 0.0
        %1183 = vmatpush.msra.mxu0 0.0
        %1184 = vmatpush.msra.mxu0 0.0
        %1185 = vmatpush.msra.mxu0 0.0
        %1186 = vmatpush.msra.mxu0 0.0
        %1187 = vmatpush.msra.mxu0 0.0
        %1188 = vmatpush.msra.mxu0 0.0
        %1189 = vmatpush.msra.mxu0 0.0
        %1190 = vmatpush.msra.mxu0 %v1170
        %1191 = vmatmul.f32.gmra.mxu0 %v1173
        %v1192 = vpop.f32.mrf.mxu0
        %v1193 = vadd.f32 0.0, %v1192
        %1194 = vdwg.mxu0
        %1195 = vrot.lane.b32.xlu0 %v768, 48
        %v1196 = vpop.permute.xlu0 %1195
        %v1199 = vsel %vm777, %v1168, 0
        %1201 = vmatpush.msra.mxu0 0.0
        %1202 = vmatpush.msra.mxu0 0.0
        %1203 = vmatpush.msra.mxu0 0.0
        %1204 = vmatpush.msra.mxu0 0.0
        %1205 = vmatpush.msra.mxu0 0.0
        %1206 = vmatpush.msra.mxu0 0.0
        %1207 = vmatpush.msra.mxu0 0.0
        %1208 = vmatpush.msra.mxu0 0.0
        %1209 = vmatpush.msra.mxu0 0.0
        %1210 = vmatpush.msra.mxu0 0.0
        %1211 = vmatpush.msra.mxu0 0.0
        %1212 = vmatpush.msra.mxu0 0.0
        %1213 = vmatpush.msra.mxu0 0.0
        %1214 = vmatpush.msra.mxu0 0.0
        %1215 = vmatpush.msra.mxu0 0.0
        %1216 = vmatpush.msra.mxu0 %v1196
        %1217 = vmatmul.f32.gmra.mxu0 %v1199
        %v1218 = vpop.f32.mrf.mxu0
        %v1219 = vadd.f32 0.0, %v1218
        %1220 = vdwg.mxu0
        %v1222 = vsel %vm777, %v1193, 0
        %v1225 = vsel %vm777, %v1219, 0
        %1227 = vmatpush.msra.mxu0 0.0
        %1228 = vmatpush.msra.mxu0 0.0
        %1229 = vmatpush.msra.mxu0 0.0
        %1230 = vmatpush.msra.mxu0 0.0
        %1231 = vmatpush.msra.mxu0 0.0
        %1232 = vmatpush.msra.mxu0 0.0
        %1233 = vmatpush.msra.mxu0 0.0
        %1234 = vmatpush.msra.mxu0 0.0
        %1235 = vmatpush.msra.mxu0 0.0
        %1236 = vmatpush.msra.mxu0 0.0
        %1237 = vmatpush.msra.mxu0 0.0
        %1238 = vmatpush.msra.mxu0 0.0
        %1239 = vmatpush.msra.mxu0 0.0
        %1240 = vmatpush.msra.mxu0 0.0
        %1241 = vmatpush.msra.mxu0 0.0
        %1242 = vmatpush.msra.mxu0 %v772
        %1243 = vmatmul.f32.gmra.mxu0 %v1222
        %v1244 = vpop.f32.mrf.mxu0
        %v1245 = vadd.f32 0.0, %v1244
        %1246 = vmatmul.f32.gmra.mxu0 %v1225
        %v1247 = vpop.f32.mrf.mxu0
        %v1248 = vadd.f32 0.0, %v1247
        %1249 = vdwg.mxu0
        %v1250 = vadd.f32 %v1086, %v1245
        %v1251 = vadd.f32 %v1089, %v1248
        %1252 = vrot.lane.b32.xlu0 %v765, 104
        %v1253 = vpop.permute.xlu0 %1252
        %1254 = vrot.lane.b32.xlu0 %v765, 72
        %v1255 = vpop.permute.xlu0 %1254
        %v1256 = vsel %vm777, %v1253, 0
        %v1258 = vsel %vm777, %v1255, 0
        %1260 = vmatpush.xpose.msra.mxu0 0.0
        %1261 = vmatpush.xpose.msra.mxu0 0.0
        %1262 = vmatpush.xpose.msra.mxu0 0.0
        %1263 = vmatpush.xpose.msra.mxu0 0.0
        %1264 = vmatpush.xpose.msra.mxu0 0.0
        %1265 = vmatpush.xpose.msra.mxu0 0.0
        %1266 = vmatpush.xpose.msra.mxu0 0.0
        %1267 = vmatpush.xpose.msra.mxu0 0.0
        %1268 = vmatpush.xpose.msra.mxu0 0.0
        %1269 = vmatpush.xpose.msra.mxu0 0.0
        %1270 = vmatpush.xpose.msra.mxu0 0.0
        %1271 = vmatpush.xpose.msra.mxu0 0.0
        %1272 = vmatpush.xpose.msra.mxu0 0.0
        %1273 = vmatpush.xpose.msra.mxu0 0.0
        %1274 = vmatpush.xpose.msra.mxu0 0.0
        %1275 = vmatpush.xpose.msra.mxu0 %v1258
        %1276 = vmatmul.f32.gmra.mxu0 %v1256
        %v1277 = vpop.f32.mrf.mxu0
        %v1278 = vadd.f32 0.0, %v1277
        %1279 = vdwg.mxu0
        %1280 = vrot.lane.b32.xlu0 %v768, 104
        %v1281 = vpop.permute.xlu0 %1280
        %1282 = vrot.lane.b32.xlu0 %v768, 72
        %v1283 = vpop.permute.xlu0 %1282
        %v1284 = vsel %vm777, %v1281, 0
        %v1286 = vsel %vm777, %v1283, 0
        %1288 = vmatpush.xpose.msra.mxu0 0.0
        %1289 = vmatpush.xpose.msra.mxu0 0.0
        %1290 = vmatpush.xpose.msra.mxu0 0.0
        %1291 = vmatpush.xpose.msra.mxu0 0.0
        %1292 = vmatpush.xpose.msra.mxu0 0.0
        %1293 = vmatpush.xpose.msra.mxu0 0.0
        %1294 = vmatpush.xpose.msra.mxu0 0.0
        %1295 = vmatpush.xpose.msra.mxu0 0.0
        %1296 = vmatpush.xpose.msra.mxu0 0.0
        %1297 = vmatpush.xpose.msra.mxu0 0.0
        %1298 = vmatpush.xpose.msra.mxu0 0.0
        %1299 = vmatpush.xpose.msra.mxu0 0.0
        %1300 = vmatpush.xpose.msra.mxu0 0.0
        %1301 = vmatpush.xpose.msra.mxu0 0.0
        %1302 = vmatpush.xpose.msra.mxu0 0.0
        %1303 = vmatpush.xpose.msra.mxu0 %v1286
        %1304 = vmatmul.f32.gmra.mxu0 %v1284
        %v1305 = vpop.f32.mrf.mxu0
        %v1306 = vadd.f32 0.0, %v1305
        %1307 = vdwg.mxu0
        %v1308 = vsel %vm777, %v1278, -inf
        %1309 = vmax.xlane.f32.xlu0 %v1308
        %v1310 = vpop.xlane.xlu0 %1309
        %v1311 = vsel %vm777, %v1306, -inf
        %1312 = vmax.xlane.f32.xlu0 %v1311
        %v1313 = vpop.xlane.xlu0 %1312
        %v1314 = vsub.f32 %v1278, %v1310
        %v1315 = vsub.f32 %v1306, %v1313
        %v1316 = vmul.f32 %v1314, 1.442695
        %v1317 = vpow.pop %v1316
        %v1318 = vmul.f32 %v1315, 1.442695
        %v1319 = vpow.pop %v1318
        %v1320 = vsel %vm777, %v1317, 0.0
        %1321 = vadd.xlane.f32.xlu0 %v1320
        %v1322 = vpop.xlane.xlu0 %1321
        %v1323 = vsel %vm777, %v1319, 0.0
        %1324 = vadd.xlane.f32.xlu0 %v1323
        %v1325 = vpop.xlane.xlu0 %1324
        %v1326 = vrcp.pop %v1322
        %v1327 = vrcp.pop %v1325
        %v1328 = vmul.f32 %v1317, %v1326
        %v1329 = vmul.f32 %v1319, %v1327
        %1330 = vrot.lane.b32.xlu0 %v765, 40
        %v1331 = vpop.permute.xlu0 %1330
        %v1334 = vsel %vm777, %v1328, 0
        %1336 = vmatpush.msra.mxu0 0.0
        %1337 = vmatpush.msra.mxu0 0.0
        %1338 = vmatpush.msra.mxu0 0.0
        %1339 = vmatpush.msra.mxu0 0.0
        %1340 = vmatpush.msra.mxu0 0.0
        %1341 = vmatpush.msra.mxu0 0.0
        %1342 = vmatpush.msra.mxu0 0.0
        %1343 = vmatpush.msra.mxu0 0.0
        %1344 = vmatpush.msra.mxu0 0.0
        %1345 = vmatpush.msra.mxu0 0.0
        %1346 = vmatpush.msra.mxu0 0.0
        %1347 = vmatpush.msra.mxu0 0.0
        %1348 = vmatpush.msra.mxu0 0.0
        %1349 = vmatpush.msra.mxu0 0.0
        %1350 = vmatpush.msra.mxu0 0.0
        %1351 = vmatpush.msra.mxu0 %v1331
        %1352 = vmatmul.f32.gmra.mxu0 %v1334
        %v1353 = vpop.f32.mrf.mxu0
        %v1354 = vadd.f32 0.0, %v1353
        %1355 = vdwg.mxu0
        %1356 = vrot.lane.b32.xlu0 %v768, 40
        %v1357 = vpop.permute.xlu0 %1356
        %v1360 = vsel %vm777, %v1329, 0
        %1362 = vmatpush.msra.mxu0 0.0
        %1363 = vmatpush.msra.mxu0 0.0
        %1364 = vmatpush.msra.mxu0 0.0
        %1365 = vmatpush.msra.mxu0 0.0
        %1366 = vmatpush.msra.mxu0 0.0
        %1367 = vmatpush.msra.mxu0 0.0
        %1368 = vmatpush.msra.mxu0 0.0
        %1369 = vmatpush.msra.mxu0 0.0
        %1370 = vmatpush.msra.mxu0 0.0
        %1371 = vmatpush.msra.mxu0 0.0
        %1372 = vmatpush.msra.mxu0 0.0
        %1373 = vmatpush.msra.mxu0 0.0
        %1374 = vmatpush.msra.mxu0 0.0
        %1375 = vmatpush.msra.mxu0 0.0
        %1376 = vmatpush.msra.mxu0 0.0
        %1377 = vmatpush.msra.mxu0 %v1357
        %1378 = vmatmul.f32.gmra.mxu0 %v1360
        %v1379 = vpop.f32.mrf.mxu0
        %v1380 = vadd.f32 0.0, %v1379
        %1381 = vdwg.mxu0
        %v1383 = vsel %vm777, %v1354, 0
        %v1386 = vsel %vm777, %v1380, 0
        %1388 = vmatpush.msra.mxu0 0.0
        %1389 = vmatpush.msra.mxu0 0.0
        %1390 = vmatpush.msra.mxu0 0.0
        %1391 = vmatpush.msra.mxu0 0.0
        %1392 = vmatpush.msra.mxu0 0.0
        %1393 = vmatpush.msra.mxu0 0.0
        %1394 = vmatpush.msra.mxu0 0.0
        %1395 = vmatpush.msra.mxu0 0.0
        %1396 = vmatpush.msra.mxu0 0.0
        %1397 = vmatpush.msra.mxu0 0.0
        %1398 = vmatpush.msra.mxu0 0.0
        %1399 = vmatpush.msra.mxu0 0.0
        %1400 = vmatpush.msra.mxu0 0.0
        %1401 = vmatpush.msra.mxu0 0.0
        %1402 = vmatpush.msra.mxu0 0.0
        %1403 = vmatpush.msra.mxu0 %v773
        %1404 = vmatmul.f32.gmra.mxu0 %v1383
        %v1405 = vpop.f32.mrf.mxu0
        %v1406 = vadd.f32 0.0, %v1405
        %1407 = vmatmul.f32.gmra.mxu0 %v1386
        %v1408 = vpop.f32.mrf.mxu0
        %v1409 = vadd.f32 0.0, %v1408
        %1410 = vdwg.mxu0
        %v1411 = vadd.f32 %v1250, %v1406
        %v1412 = vadd.f32 %v1251, %v1409
        %v1413 = vld [vmem:[%s700] sm:$0x1]
        %v1415 = vperm.slane %v1413, 0
        %v1417 = vadd.f32 %v1411, %v1415
        %v1418 = vadd.f32 %v1412, %v1415
        %v1419 = vadd.f32 %v730, %v1417
        %v1420 = vadd.f32 %v731, %v1418
        %v1421 = vld [vmem:[%s587] sm:$0x1]
        %v1422 = vld [vmem:[%s703] sm:$0x1]
        %v1423 = vsel %vm740, %v1419, 0.0
        %1424 = vadd.xlane.f32.xlu0 %v1423
        %v1425 = vpop.xlane.xlu0 %1424
        %v1426 = vsel %vm740, %v1420, 0.0
        %1427 = vadd.xlane.f32.xlu0 %v1426
        %v1428 = vpop.xlane.xlu0 %1427
        %v1429 = vrcp.pop 32.0
        %v1430 = vmul.f32 32.0, %v1429
        %v1431 = vsub.f32 1.0, %v1430
        %v1432 = vmul.f32 %v1429, %v1431
        %v1433 = vadd.f32 %v1429, %v1432
        %vm1434 = vweird.f32 %v1429
        %v1435 = vsel %vm1434, %v1429, %v1433
        %v1436 = vmul.f32 %v1425, %v1435
        %v1437 = vmul.f32 %v1428, %v1435
        %v1438 = vsub.f32 %v1419, %v1436
        %v1439 = vsub.f32 %v1420, %v1437
        %v1440 = vmul.f32 %v1438, %v1438
        %v1441 = vmul.f32 %v1439, %v1439
        %v1442 = vsel %vm740, %v1440, 0.0
        %1443 = vadd.xlane.f32.xlu0 %v1442
        %v1444 = vpop.xlane.xlu0 %1443
        %v1445 = vsel %vm740, %v1441, 0.0
        %1446 = vadd.xlane.f32.xlu0 %v1445
        %v1447 = vpop.xlane.xlu0 %1446
        %v1448 = vmul.f32 %v1444, %v1435
        %v1449 = vmul.f32 %v1447, %v1435
        %v1450 = vadd.f32 %v1448, 1e-05
        %v1451 = vadd.f32 %v1449, 1e-05
        %v1452 = vrsqrt.pop %v1450
        %v1453 = vmul.f32 %v1452, %v1450
        %v1454 = vmul.f32 %v1453, %v1452
        %v1455 = vmul.f32 0.5, %v1454
        %v1456 = vsub.f32 1.5, %v1455
        %v1457 = vmul.f32 %v1452, %v1456
        %vm1458 = vweird.f32 %v1450
        %vm1459 = vweird.f32 %v1452
        %vm1460 = vmor %vm1458, %vm1459
        %v1461 = vsel %vm1460, %v1452, %v1457
        %v1462 = vrsqrt.pop %v1451
        %v1463 = vmul.f32 %v1462, %v1451
        %v1464 = vmul.f32 %v1463, %v1462
        %v1465 = vmul.f32 0.5, %v1464
        %v1466 = vsub.f32 1.5, %v1465
        %v1467 = vmul.f32 %v1462, %v1466
        %vm1468 = vweird.f32 %v1451
        %vm1469 = vweird.f32 %v1462
        %vm1470 = vmor %vm1468, %vm1469
        %v1471 = vsel %vm1470, %v1462, %v1467
        %v1472 = vmul.f32 %v1438, %v1461
        %v1473 = vmul.f32 %v1439, %v1471
        %v1475 = vperm.slane %v1421, 0
        %v1477 = vmul.f32 %v1472, %v1475
        %v1478 = vmul.f32 %v1473, %v1475
        %v1480 = vperm.slane %v1422, 0
        %v1482 = vadd.f32 %v1477, %v1480
        %v1483 = vadd.f32 %v1478, %v1480
        %v1484 = vld [vmem:[%s708] sm:$0xff]
        %v1485 = vld [vmem:[%s708 + $0x8] sm:$0xff]
        %v1486 = vld [vmem:[%s708 + $0x10] sm:$0xff]
        %v1487 = vld [vmem:[%s708 + $0x18] sm:$0xff]
        %v1488 = vld [vmem:[%s711] sm:$0x1]
        %v1490 = vperm.slane %v1488, 0
        %v1493 = vsel %vm740, %v1482, 0
        %v1496 = vsel %vm740, %v1483, 0
        %1498 = vmatpush.msra.mxu0 0.0
        %1499 = vmatpush.msra.mxu0 0.0
        %1500 = vmatpush.msra.mxu0 0.0
        %1501 = vmatpush.msra.mxu0 0.0
        %1502 = vmatpush.msra.mxu0 0.0
        %1503 = vmatpush.msra.mxu0 0.0
        %1504 = vmatpush.msra.mxu0 0.0
        %1505 = vmatpush.msra.mxu0 0.0
        %1506 = vmatpush.msra.mxu0 0.0
        %1507 = vmatpush.msra.mxu0 0.0
        %1508 = vmatpush.msra.mxu0 0.0
        %1509 = vmatpush.msra.mxu0 0.0
        %1510 = vmatpush.msra.mxu0 %v1487
        %1511 = vmatpush.msra.mxu0 %v1486
        %1512 = vmatpush.msra.mxu0 %v1485
        %1513 = vmatpush.msra.mxu0 %v1484
        %1514 = vmatmul.f32.gmra.mxu0 %v1493
        %v1515 = vpop.f32.mrf.mxu0
        %v1516 = vadd.f32 %v1490, %v1515
        %1517 = vmatmul.f32.gmra.mxu0 %v1496
        %v1518 = vpop.f32.mrf.mxu0
        %v1519 = vadd.f32 %v1490, %v1518
        %1520 = vdwg.mxu0
        %v1521 = vmax.f32 %v1516, 0.0
        %v1522 = vmax.f32 %v1519, 0.0
        %v1523 = vld [vmem:[%s716] sm:$0xff]
        %v1524 = vld [vmem:[%s716 + $0x8] sm:$0xff]
        %v1525 = vld [vmem:[%s716 + $0x10] sm:$0xff]
        %v1526 = vld [vmem:[%s716 + $0x18] sm:$0xff]
        %v1527 = vld [vmem:[%s716 + $0x20] sm:$0xff]
        %v1528 = vld [vmem:[%s716 + $0x28] sm:$0xff]
        %v1529 = vld [vmem:[%s716 + $0x30] sm:$0xff]
        %v1530 = vld [vmem:[%s716 + $0x38] sm:$0xff]
        %v1531 = vld [vmem:[%s719] sm:$0x1]
        %v1533 = vperm.slane %v1531, 0
        %vm1535 = vcmask 523264
        %v1537 = vsel %vm1535, %v1521, 0
        %v1540 = vsel %vm1535, %v1522, 0
        %1542 = vmatpush.msra.mxu0 0.0
        %1543 = vmatpush.msra.mxu0 0.0
        %1544 = vmatpush.msra.mxu0 0.0
        %1545 = vmatpush.msra.mxu0 0.0
        %1546 = vmatpush.msra.mxu0 0.0
        %1547 = vmatpush.msra.mxu0 0.0
        %1548 = vmatpush.msra.mxu0 0.0
        %1549 = vmatpush.msra.mxu0 0.0
        %1550 = vmatpush.msra.mxu0 %v1530
        %1551 = vmatpush.msra.mxu0 %v1529
        %1552 = vmatpush.msra.mxu0 %v1528
        %1553 = vmatpush.msra.mxu0 %v1527
        %1554 = vmatpush.msra.mxu0 %v1526
        %1555 = vmatpush.msra.mxu0 %v1525
        %1556 = vmatpush.msra.mxu0 %v1524
        %1557 = vmatpush.msra.mxu0 %v1523
        %1558 = vmatmul.f32.gmra.mxu0 %v1537
        %v1559 = vpop.f32.mrf.mxu0
        %v1560 = vadd.f32 %v1533, %v1559
        %1561 = vmatmul.f32.gmra.mxu0 %v1540
        %v1562 = vpop.f32.mrf.mxu0
        %v1563 = vadd.f32 %v1533, %v1562
        %1564 = vdwg.mxu0
        %v1565 = vadd.f32 %v1482, %v1560
        %v1566 = vadd.f32 %v1483, %v1563
        %v1567 = vld [vmem:[%s596] sm:$0x1]
        %v1568 = vld [vmem:[%s605] sm:$0x1]
        %v1569 = vsel %vm740, %v1565, 0.0
        %1570 = vadd.xlane.f32.xlu0 %v1569
        %v1571 = vpop.xlane.xlu0 %1570
        %v1572 = vsel %vm740, %v1566, 0.0
        %1573 = vadd.xlane.f32.xlu0 %v1572
        %v1574 = vpop.xlane.xlu0 %1573
        %v1575 = vmul.f32 %v1571, %v1435
        %v1576 = vmul.f32 %v1574, %v1435
        %v1577 = vsub.f32 %v1565, %v1575
        %v1578 = vsub.f32 %v1566, %v1576
        %v1579 = vmul.f32 %v1577, %v1577
        %v1580 = vmul.f32 %v1578, %v1578
        %v1581 = vsel %vm740, %v1579, 0.0
        %1582 = vadd.xlane.f32.xlu0 %v1581
        %v1583 = vpop.xlane.xlu0 %1582
        %v1584 = vsel %vm740, %v1580, 0.0
        %1585 = vadd.xlane.f32.xlu0 %v1584
        %v1586 = vpop.xlane.xlu0 %1585
        %v1587 = vmul.f32 %v1583, %v1435
        %v1588 = vmul.f32 %v1586, %v1435
        %v1589 = vadd.f32 %v1587, 1e-05
        %v1590 = vadd.f32 %v1588, 1e-05
        %v1591 = vrsqrt.pop %v1589
        %v1592 = vmul.f32 %v1591, %v1589
        %v1593 = vmul.f32 %v1592, %v1591
        %v1594 = vmul.f32 0.5, %v1593
        %v1595 = vsub.f32 1.5, %v1594
        %v1596 = vmul.f32 %v1591, %v1595
        %vm1597 = vweird.f32 %v1589
        %vm1598 = vweird.f32 %v1591
        %vm1599 = vmor %vm1597, %vm1598
        %v1600 = vsel %vm1599, %v1591, %v1596
        %v1601 = vrsqrt.pop %v1590
        %v1602 = vmul.f32 %v1601, %v1590
        %v1603 = vmul.f32 %v1602, %v1601
        %v1604 = vmul.f32 0.5, %v1603
        %v1605 = vsub.f32 1.5, %v1604
        %v1606 = vmul.f32 %v1601, %v1605
        %vm1607 = vweird.f32 %v1590
        %vm1608 = vweird.f32 %v1601
        %vm1609 = vmor %vm1607, %vm1608
        %v1610 = vsel %vm1609, %v1601, %v1606
        %v1611 = vmul.f32 %v1577, %v1600
        %v1612 = vmul.f32 %v1578, %v1610
        %v1614 = vperm.slane %v1567, 0
        %v1616 = vmul.f32 %v1611, %v1614
        %v1617 = vmul.f32 %v1612, %v1614
        %v1619 = vperm.slane %v1568, 0
        %v1621 = vadd.f32 %v1616, %v1619
        %v1622 = vadd.f32 %v1617, %v1619
        %1623 = vst.msk [vmem:[#allocation2] sm:$0xff] %vm740, %v1621
        %1624 = vst.msk [vmem:[#allocation2 + $0x8] sm:$0xff] %vm740, %v1622
        %p1625 = scmp.eq.s32.totalorder %s37, 1
        // Predicated region
        $region97: #{tpu_custom_call.1} parent=71 // pred_check
          %p1626 = pneg %p1625
        $region98: #{tpu_custom_call.1} parent=71 // pred_check_branch
          %1628 = sbr.rel (%p1626) target = $region100
        $region99: #{tpu_custom_call.1} parent=71 // pred_region
          %1629 = vst.msk [vmem:[#allocation12] sm:$0xff] %vm740, %v1621
          %1630 = vst.msk [vmem:[#allocation12 + $0x8] sm:$0xff] %vm740, %v1622
        $region100: #{tpu_custom_call.1} parent=71 // pred_fallthru
          _
        // Predicated region
        $region101: #{tpu_custom_call.1} parent=71 // pred_check
          %p1631 = pneg %p400
        $region102: #{tpu_custom_call.1} parent=71 // pred_check_branch
          %1633 = sbr.rel (%p1631) target = $region104
        $region103: #{tpu_custom_call.1} parent=71 // pred_region
          %s1634 = smul.u32 2, %s36
          %1636 = vsyncadd [#allocation5], 0
          %s1637 = smul.addr %s1634, 8
          %s1638 = scalar_lea.hbm %s13, %s1637
          %s1639 = sshll.u32 [#allocation12], 4
          %s1640 = int_to_ptr.vmem [resolvable:$true] %s1639
          %s1641 = sshll.u32 %s1638, 4
          %s1642 = int_to_ptr.hbm [resolvable:$true] %s1641
          %1647 = dma.vmem_to_hbm [thread:$0]  %s1640, 256, %s1642, [#allocation5], 128, 128, 8
        $region104: #{tpu_custom_call.1} parent=71 // pred_fallthru
          _
        // Predicated region
        $region105: #{tpu_custom_call.1} parent=71 // pred_check
          %p1648 = pneg %p400
        $region106: #{tpu_custom_call.1} parent=71 // pred_check_branch
          %1650 = sbr.rel (%p1648) target = $region108
        $region107: #{tpu_custom_call.1} parent=71 // pred_region
          %1652 = dma.done [#allocation5], 256
        $region108: #{tpu_custom_call.1} parent=71 // pred_fallthru
          _
      $region72: #{tpu_custom_call.1} parent=5 // pred_fallthru
        _
      %p1653 = scmp.le.s32.totalorder 2, %s27
      // Predicated region
      $region109: #{tpu_custom_call.1} parent=5 // pred_check
        %p1654 = pneg %p1653
      $region110: #{tpu_custom_call.1} parent=5 // pred_check_branch
        %1656 = sbr.rel (%p1654) target = $region112
      $region111: #{tpu_custom_call.1} parent=5 // pred_region
        %s1657 = ssub.s32 %s27, 2
      $region112: #{tpu_custom_call.1} parent=5 // pred_fallthru
        _
    $region6: #{tpu_custom_call.1} parent=1 // loop_footer
      %s31 = sadd.s32 1, %s27
    $region7: #{tpu_custom_call.1} parent=1 // loop_footer_branch
      %26 = sbr.rel target = $region3
    $region8: #{tpu_custom_call.1} parent=1 // loop_exit
      _
    %1658 = vsyncpa [#allocation4], 1
    %s1659 = scalar_lea.sflag [#allocation4], 1
    %1660 = vsyncpa %s1659, 1
    %1661 = vsyncpa [#allocation7], 1
    %s1662 = scalar_lea.sflag [#allocation7], 1
    %1663 = vsyncpa %s1662, 1
    %1664 = vsyncpa [#allocation10], 1
    %s1665 = scalar_lea.sflag [#allocation10], 1
    %1666 = vsyncpa %s1665, 1
    %1667 = vsyncpa [#allocation5], 1
    %s1668 = scalar_lea.sflag [#allocation5], 1
    %1669 = vsyncpa %s1668, 1

</llo_original>
